<compile_context>
chip_gen: v6e
topology: v6e:2x2x1
jax: 0.10.0
libtpu: 0.0.40
codegen_flags: <defaults>
</compile_context>

<pallas_src>
import jax
import jax.numpy as jnp
import numpy as np
from jax.experimental import pallas as pl
from jax.experimental.pallas import tpu as pltpu


def _round_up(x, m):
    return (x + m - 1) // m * m


def _cdiv(a, b):
    return -(-a // b)


_SQRT_2_OVER_PI = 0.7978845608028654


def _gelu_tanh(x):
    # TODO(synk): PyTorch nn.GELU defaults to the exact erf formulation; the
    # tanh approximation (max abs deviation ~1e-3) is used because tanh lowers
    # to the EUP slot on every TPU generation. Swap in jax.lax.erf here if
    # bit-closer parity with PyTorch is required.
    return 0.5 * x * (1.0 + jnp.tanh(_SQRT_2_OVER_PI * (x + 0.044715 * x * x * x)))


def _mlp_block_kernel(x_ref, w1_ref, b1_ref, w2_ref, b2_ref, o_ref, acc_ref):
    """One (row-tile i, d_mlp-chunk k) grid step.

        acc  = 0                                   at k == 0
        h    = GELU(x @ W1[:, k] + b1[k])          (f32 on VPU / EUP)
        acc += h(bf16) @ W2[k, :]                  (f32 MXU accumulate)
        out  = acc + b2                            at k == last
    """
    k = pl.program_id(1)

    @pl.when(k == 0)
    def _init():
        acc_ref[...] = jnp.zeros_like(acc_ref)

    x = x_ref[...].astype(jnp.bfloat16)           # bf16 operands, f32 accumulate
    h = jnp.dot(x, w1_ref[...], preferred_element_type=jnp.float32) + b1_ref[...]
    h = _gelu_tanh(h)
    # TODO(synk): optional v6e/v7x micro-opt - evaluate the GELU polynomial in
    # bf16 there (full-rate bf16 VALUs); kept f32 for v5e portability.
    acc_ref[...] += jnp.dot(h.astype(jnp.bfloat16), w2_ref[...],
                            preferred_element_type=jnp.float32)

    @pl.when(k == pl.num_programs(1) - 1)
    def _finalize():
        o_ref[...] = (acc_ref[...] + b2_ref[...]).astype(o_ref.dtype)


def _vmem_capacity_bytes():
    """Physical VMEM of the local chip; conservative (v7x) fallback."""
    try:
        info = pltpu.get_tpu_info()
        cap = int(getattr(info, "vmem_capacity_bytes", 0) or 0)
        if cap > 0:
            return cap
    except Exception:
        pass
    return 64 * 1024 * 1024


def _pad_cast_2d(a, rows, cols, dtype):
    """Pad+cast a 2-D array; no-op (no extra HBM pass) if it already matches."""
    if a.shape == (rows, cols) and a.dtype == np.dtype(dtype):
        return a
    a = a.astype(dtype)
    if a.shape == (rows, cols):
        return a
    return jnp.zeros((rows, cols), dtype).at[: a.shape[0], : a.shape[1]].set(a)


def _choose_hidden_chunk(d_in_p, d_mlp, d_out_p, tm, x_bytes, out_bytes, budget):
    """Pick the d_mlp chunk width tk (multiple of 128), largest first.

    Full residency when the VMEM budget allows (weights then single-buffered);
    otherwise stream power-of-two chunks.  Returns (tk, d_mlp_pad, nk, need).
    """
    d_mlp_p128 = _round_up(max(d_mlp, 1), 128)
    cands = {d_mlp_p128}
    c = 128
    while c < d_mlp_p128:
        cands.add(c)
        c *= 2
    cands = sorted(cands, reverse=True)

    for tk in cands:
        d_mlp_p = _round_up(d_mlp, tk)
        nk = d_mlp_p // tk
        wbuf = 1 if nk == 1 else 2                    # resident -> Buffered(1)
        need = (
            2 * tm * d_in_p * x_bytes                 # x tile, double-buffered
            + 2 * tm * d_out_p * out_bytes            # out tile, double-buffered
            + tm * d_out_p * 4                        # f32 accumulator scratch
            + wbuf * (d_in_p * tk + tk * d_out_p) * 2 # bf16 W1 / W2 chunk(s)
            + wbuf * 8 * max(tk, 128) * 4             # b1 chunk (tile-padded)
            + 8 * max(d_out_p, 128) * 4               # b2
            + tm * tk * 6                             # live h: f32 + bf16 copy
        )
        if need <= budget or tk == cands[-1]:
            return tk, d_mlp_p, nk, need


def prepare_params(params):
    """One-time pad-to-128 + f32->bf16 cast of the weights.

    Hoists the per-call HBM pad/cast passes out of the forward path for
    repeated calls (inference / step loops)."""
    w1, b1, w2, b2 = params["w1"], params["b1"], params["w2"], params["b2"]
    d_in, d_mlp = w1.shape
    d_out = w2.shape[1]
    d_in_p, d_mlp_p, d_out_p = (_round_up(d, 128) for d in (d_in, d_mlp, d_out))
    return {
        "w1": _pad_cast_2d(w1, d_in_p, d_mlp_p, jnp.bfloat16),
        "b1": _pad_cast_2d(b1.reshape(1, -1), 1, d_mlp_p, jnp.float32),
        "w2": _pad_cast_2d(w2, d_mlp_p, d_out_p, jnp.bfloat16),
        "b2": _pad_cast_2d(b2.reshape(1, -1), 1, d_out_p, jnp.float32),
        "dims": (d_in, d_mlp, d_out),
    }


def mlp_block(x, params, *, tm=None, out_dtype=None):
    """out = lin2(GELU(lin1(x))).  x: (..., embedding_dim).

    params: raw {"w1","b1","w2","b2"} or the output of prepare_params().
    out_dtype: defaults to x.dtype; pass jnp.bfloat16 to halve output HBM
    traffic if the consumer accepts it.
    Precision knob: matmul operands are bf16 with f32 MXU accumulation (GELU
    and bias adds stay f32)."""
    if "dims" in params:
        d_in, d_mlp, d_out = params["dims"]
    else:
        d_in, d_mlp = params["w1"].shape
        d_out = params["w2"].shape[1]
    assert x.shape[-1] == d_in

    w1 = params["w1"]
    b1 = params["b1"].reshape(1, -1)
    w2 = params["w2"]
    b2 = params["b2"].reshape(1, -1)

    out_dtype = x.dtype if out_dtype is None else np.dtype(out_dtype)
    x_bytes = np.dtype(x.dtype).itemsize
    out_bytes = np.dtype(out_dtype).itemsize

    lead_shape = x.shape[:-1]
    M = 1
    for s in lead_shape:
        M *= s
    x2d = x.reshape(M, d_in)

    # --- per-generation VMEM budget --------------------------------------
    cap = _vmem_capacity_bytes()
    budget = int(cap * 0.80)       # headroom for Mosaic internal scratch

    # --- row tiling: large tiles amortize grid overhead, balanced to bound
    #     M-padding waste; ensure >=2 steps so both v7x TCs get work --------
    if tm is None:
        tm = 256 if cap <= (64 << 20) else 512      # v7x : v5e/v6e
    tm = max(8, _round_up(tm, 8))
    n_row = max(1, _cdiv(M, tm))
    tm_eff = _round_up(_cdiv(M, n_row), 8)
    if _cdiv(M, tm_eff) < 2 and tm_eff >= 16:
        tm_eff = _round_up(_cdiv(M, 2), 8)
    m_p = _round_up(M, tm_eff)
    n_row = m_p // tm_eff

    # --- lane-dense feature padding + d_mlp chunk selection ----------------
    d_in_p = _round_up(d_in, 128)
    d_out_p = _round_up(d_out, 128)
    tk, d_mlp_p, nk, need = _choose_hidden_chunk(
        d_in_p, d_mlp, d_out_p, tm_eff, x_bytes, out_bytes, budget)

    vmem_limit = int(min(int(cap * 0.85), max(int(need * 1.5), 32 << 20)))

    # --- operand padding / cast (no-ops when prepare_params() was used and
    #     the dims are already 128-multiples) -------------------------------
    x_p = x2d if x2d.shape == (m_p, d_in_p) else (
        jnp.zeros((m_p, d_in_p), x.dtype).at[:M, :d_in].set(x2d))
    w1_p = _pad_cast_2d(w1, d_in_p, d_mlp_p, jnp.bfloat16)
    b1_p = _pad_cast_2d(b1, 1, d_mlp_p, jnp.float32)
    w2_p = _pad_cast_2d(w2, d_mlp_p, d_out_p, jnp.bfloat16)
    b2_p = _pad_cast_2d(b2, 1, d_out_p, jnp.float32)

    # --- cost estimate on padded shapes / actual dtypes --------------------
    weight_fetches = 1 if nk == 1 else n_row     # resident vs streamed per row tile
    cost = pl.CostEstimate(
        flops=2 * m_p * (d_in_p * d_mlp_p + d_mlp_p * d_out_p),
        transcendentals=m_p * d_mlp_p,
        bytes_accessed=(m_p * d_in_p * x_bytes
                        + m_p * d_out_p * out_bytes
                        + weight_fetches * (d_in_p * d_mlp_p + d_mlp_p * d_out_p) * 2
                        + weight_fetches * d_mlp_p * 4
                        + d_out_p * 4),
    )

    def _spec(shape, imap, mode):
        if mode is None:
            return pl.BlockSpec(shape, imap)
        return pl.BlockSpec(shape, imap, pipeline_mode=mode)

    def _run(use_buffer_hints):
        resident = pl.Buffered(1) if (use_buffer_hints and nk == 1) else None
        b2_mode = pl.Buffered(1) if use_buffer_hints else None
        return pl.pallas_call(
            _mlp_block_kernel,
            out_shape=jax.ShapeDtypeStruct((m_p, d_out_p), out_dtype),
            grid_spec=pltpu.PrefetchScalarGridSpec(
                num_scalar_prefetch=0,
                grid=(n_row, nk),
                in_specs=[
                    _spec((tm_eff, d_in_p), lambda i, k: (i, 0), None),    # x rows
                    _spec((d_in_p, tk), lambda i, k: (0, k), resident),    # W1 chunk
                    _spec((1, tk), lambda i, k: (0, k), resident),         # b1 chunk
                    _spec((tk, d_out_p), lambda i, k: (k, 0), resident),   # W2 chunk
                    _spec((1, d_out_p), lambda i, k: (0, 0), b2_mode),     # b2
                ],
                out_specs=pl.BlockSpec((tm_eff, d_out_p), lambda i, k: (i, 0)),
                scratch_shapes=[pltpu.VMEM((tm_eff, d_out_p), jnp.float32)],
            ),
            compiler_params=pltpu.CompilerParams(
                dimension_semantics=("parallel", "arbitrary"),  # rows over TCs
                vmem_limit_bytes=vmem_limit,
            ),
            cost_estimate=cost,
        )(x_p, w1_p, b1_p, w2_p, b2_p)

    try:
        out_p = _run(True)
    except Exception:
        # Fallback for JAX builds without BlockSpec(pipeline_mode=...) support;
        # only costs extra VMEM for the (then double-buffered) resident weights.
        out_p = _run(False)

    out = out_p if (m_p, d_out_p) == (M, d_out) else out_p[:M, :d_out]
    return out.reshape(*lead_shape, d_out)


def init_params(key, embedding_dim, mlp_dim, dtype=jnp.float32):
    """Deterministic nn.Linear-style init (uniform +/- 1/sqrt(fan_in))."""
    ks = jax.random.split(key, 4)

    def lin(kw, kb, fan_in, fan_out):
        bound = 1.0 / (fan_in ** 0.5)
        w = jax.random.uniform(kw, (fan_in, fan_out), dtype, -bound, bound)
        b = jax.random.uniform(kb, (fan_out,), dtype, -bound, bound)
        return w, b

    w1, b1 = lin(ks[0], ks[1], embedding_dim, mlp_dim)   # lin1
    w2, b2 = lin(ks[2], ks[3], mlp_dim, embedding_dim)   # lin2
    return {"w1": w1, "b1": b1, "w2": w2, "b2": b2}


def _reference_bf16(x, p):
    """Pure-JAX reference replicating the kernel's bf16-operand/f32-accumulate
    numerics and tanh-GELU, for a tight correctness check."""
    xb = x.astype(jnp.bfloat16)
    h = jnp.dot(xb, p["w1"].astype(jnp.bfloat16),
                preferred_element_type=jnp.float32) + p["b1"]
    h = _gelu_tanh(h)
    out = jnp.dot(h.astype(jnp.bfloat16), p["w2"].astype(jnp.bfloat16),
                  preferred_element_type=jnp.float32) + p["b2"]
    return out


def _reference_f32(x, p):
    """Full-precision, exact-GELU (erf) reference matching PyTorch semantics."""
    h = x @ p["w1"] + p["b1"]
    h = 0.5 * h * (1.0 + jax.scipy.special.erf(h / jnp.sqrt(2.0).astype(h.dtype)))
    return h @ p["w2"] + p["b2"]


if __name__ == "__main__":
    key = jax.random.PRNGKey(0)
    B, S, EMBED, MLP = 2, 8, 32, 128      # small shapes; M = 16 token rows
    kx, kp = jax.random.split(key)
    x = jax.random.normal(kx, (B, S, EMBED), jnp.float32)
    params = init_params(kp, EMBED, MLP)
    prepared = prepare_params(params)     # hoist pad + bf16 cast out of call path

    out = mlp_block(x, prepared)
    out = jax.block_until_ready(out)
    assert out.shape == (B, S, EMBED)
    assert out.dtype == x.dtype

    ref_tight = _reference_bf16(x, params)
    ref_loose = _reference_f32(x, params)
    assert jnp.allclose(out, ref_tight, atol=5e-3, rtol=5e-3), \
        "mismatch vs bf16-matched JAX reference"
    assert jnp.allclose(out, ref_loose, atol=5e-2, rtol=5e-2), \
        "mismatch vs f32 exact-GELU reference"
    print("KERNEL_OK")
</pallas_src>

<mosaic_0001>
module attributes {stable_mosaic.version = 11 : i64} {
  func.func @_mlp_block_kernel(%arg0: i32, %arg1: i32, %arg2: memref<8x128xf32, #tpu.memory_space<vmem>>, %arg3: memref<128x128xbf16, #tpu.memory_space<vmem>>, %arg4: memref<1x128xf32, #tpu.memory_space<vmem>>, %arg5: memref<128x128xbf16, #tpu.memory_space<vmem>>, %arg6: memref<1x128xf32, #tpu.memory_space<vmem>>, %arg7: memref<8x128xf32, #tpu.memory_space<vmem>>, %arg8: memref<8x128xf32, #tpu.memory_space<vmem>>) attributes {dimension_semantics = [#tpu.dimension_semantics<parallel>, #tpu.dimension_semantics<arbitrary>], iteration_bounds = array<i64: 2, 1>, scalar_prefetch = 0 : i64, scratch_operands = 1 : i64, tpu.core_type = #tpu.core_type<tc>, window_params = [{transform_indices = @transform_0, window_bounds = array<i64: 8, 128>}, {pipeline_mode = #tpu.pipeline_mode<synchronous>, transform_indices = @transform_1, window_bounds = array<i64: 128, 128>}, {pipeline_mode = #tpu.pipeline_mode<synchronous>, transform_indices = @transform_2, window_bounds = array<i64: 1, 128>}, {pipeline_mode = #tpu.pipeline_mode<synchronous>, transform_indices = @transform_3, window_bounds = array<i64: 128, 128>}, {pipeline_mode = #tpu.pipeline_mode<synchronous>, transform_indices = @transform_4, window_bounds = array<i64: 1, 128>}, {transform_indices = @transform_5, window_bounds = array<i64: 8, 128>}]} {
    %c0_i32 = arith.constant 0 : i32
    %0 = arith.cmpi eq, %arg1, %c0_i32 : i32
    %1 = arith.extui %0 : i1 to i32
    %c0_i32_0 = arith.constant 0 : i32
    %2 = arith.cmpi ne, %1, %c0_i32_0 : i32
    scf.if %2 {
      %cst_19 = arith.constant 0.000000e+00 : f32
      %32 = vector.broadcast %cst_19 : f32 to vector<8x128xf32>
      %c0_20 = arith.constant 0 : index
      %c0_21 = arith.constant 0 : index
      %33 = vector.load %arg8[%c0_20, %c0_21] : memref<8x128xf32, #tpu.memory_space<vmem>>, vector<8x128xf32>
      tpu.vector_store %arg8[%c0_20, %c0_21], %32 {strides = array<i32>} : memref<8x128xf32, #tpu.memory_space<vmem>>, vector<8x128xf32>,
    } else {
    }
    %c0 = arith.constant 0 : index
    %c0_1 = arith.constant 0 : index
    %3 = vector.load %arg2[%c0, %c0_1] : memref<8x128xf32, #tpu.memory_space<vmem>>, vector<8x128xf32>
    %4 = arith.truncf %3 : vector<8x128xf32> to vector<8x128xbf16>
    %c0_2 = arith.constant 0 : index
    %c0_3 = arith.constant 0 : index
    %5 = vector.load %arg3[%c0_2, %c0_3] : memref<128x128xbf16, #tpu.memory_space<vmem>>, vector<128x128xbf16>
    %cst = arith.constant dense<0.000000e+00> : vector<8x128xf32>
    %6 = tpu.matmul %4, %5, %cst {dimension_numbers = #tpu.dot_dimension_numbers<[1], [0], [0], [1], [0, 0, 1, 1], [], []>} : vector<8x128xbf16>, vector<128x128xbf16>, vector<8x128xf32> -> vector<8x128xf32>
    %c0_4 = arith.constant 0 : index
    %c0_5 = arith.constant 0 : index
    %7 = vector.load %arg4[%c0_4, %c0_5] : memref<1x128xf32, #tpu.memory_space<vmem>>, vector<1x128xf32>
    %8 = vector.broadcast %7 : vector<1x128xf32> to vector<8x128xf32>
    %9 = arith.addf %6, %8 : vector<8x128xf32>
    %cst_6 = arith.constant 5.000000e-01 : f32
    %10 = vector.broadcast %cst_6 : f32 to vector<8x128xf32>
    %11 = arith.mulf %10, %9 : vector<8x128xf32>
    %cst_7 = arith.constant 4.471500e-02 : f32
    %12 = vector.broadcast %cst_7 : f32 to vector<8x128xf32>
    %13 = arith.mulf %12, %9 : vector<8x128xf32>
    %14 = arith.mulf %13, %9 : vector<8x128xf32>
    %15 = arith.mulf %14, %9 : vector<8x128xf32>
    %16 = arith.addf %9, %15 : vector<8x128xf32>
    %cst_8 = arith.constant 0.797884583 : f32
    %17 = vector.broadcast %cst_8 : f32 to vector<8x128xf32>
    %18 = arith.mulf %17, %16 : vector<8x128xf32>
    %19 = math.tanh %18 : vector<8x128xf32>
    %cst_9 = arith.constant 1.000000e+00 : f32
    %20 = vector.broadcast %cst_9 : f32 to vector<8x128xf32>
    %21 = arith.addf %20, %19 : vector<8x128xf32>
    %22 = arith.mulf %11, %21 : vector<8x128xf32>
    %c0_10 = arith.constant 0 : index
    %c0_11 = arith.constant 0 : index
    %23 = vector.load %arg8[%c0_10, %c0_11] : memref<8x128xf32, #tpu.memory_space<vmem>>, vector<8x128xf32>
    %24 = arith.truncf %22 : vector<8x128xf32> to vector<8x128xbf16>
    %c0_12 = arith.constant 0 : index
    %c0_13 = arith.constant 0 : index
    %25 = vector.load %arg5[%c0_12, %c0_13] : memref<128x128xbf16, #tpu.memory_space<vmem>>, vector<128x128xbf16>
    %cst_14 = arith.constant dense<0.000000e+00> : vector<8x128xf32>
    %26 = tpu.matmul %24, %25, %cst_14 {dimension_numbers = #tpu.dot_dimension_numbers<[1], [0], [0], [1], [0, 0, 1, 1], [], []>} : vector<8x128xbf16>, vector<128x128xbf16>, vector<8x128xf32> -> vector<8x128xf32>
    %27 = arith.addf %23, %26 : vector<8x128xf32>
    %c0_15 = arith.constant 0 : index
    %c0_16 = arith.constant 0 : index
    %28 = vector.load %arg8[%c0_15, %c0_16] : memref<8x128xf32, #tpu.memory_space<vmem>>, vector<8x128xf32>
    tpu.vector_store %arg8[%c0_15, %c0_16], %27 {strides = array<i32>} : memref<8x128xf32, #tpu.memory_space<vmem>>, vector<8x128xf32>,
    %c0_i32_17 = arith.constant 0 : i32
    %29 = arith.cmpi eq, %arg1, %c0_i32_17 : i32
    %30 = arith.extui %29 : i1 to i32
    %c0_i32_18 = arith.constant 0 : i32
    %31 = arith.cmpi ne, %30, %c0_i32_18 : i32
    scf.if %31 {
      %c0_19 = arith.constant 0 : index
      %c0_20 = arith.constant 0 : index
      %32 = vector.load %arg8[%c0_19, %c0_20] : memref<8x128xf32, #tpu.memory_space<vmem>>, vector<8x128xf32>
      %c0_21 = arith.constant 0 : index
      %c0_22 = arith.constant 0 : index
      %33 = vector.load %arg6[%c0_21, %c0_22] : memref<1x128xf32, #tpu.memory_space<vmem>>, vector<1x128xf32>
      %34 = vector.broadcast %33 : vector<1x128xf32> to vector<8x128xf32>
      %35 = arith.addf %32, %34 : vector<8x128xf32>
      %c0_23 = arith.constant 0 : index
      %c0_24 = arith.constant 0 : index
      %36 = vector.load %arg7[%c0_23, %c0_24] : memref<8x128xf32, #tpu.memory_space<vmem>>, vector<8x128xf32>
      tpu.vector_store %arg7[%c0_23, %c0_24], %35 {strides = array<i32>} : memref<8x128xf32, #tpu.memory_space<vmem>>, vector<8x128xf32>,
    } else {
    }
    return
  }
  func.func @transform_0(%arg0: i32, %arg1: i32) -> (i32, i32) {
    %c0_i32 = arith.constant 0 : i32
    %c0_i32_0 = arith.constant 0 : i32
    return %arg0, %c0_i32 : i32, i32
  }
  func.func @transform_1(%arg0: i32, %arg1: i32) -> (i32, i32) {
    %c0_i32 = arith.constant 0 : i32
    %c0_i32_0 = arith.constant 0 : i32
    return %c0_i32, %arg1 : i32, i32
  }
  func.func @transform_2(%arg0: i32, %arg1: i32) -> (i32, i32) {
    %c0_i32 = arith.constant 0 : i32
    %c0_i32_0 = arith.constant 0 : i32
    return %c0_i32, %arg1 : i32, i32
  }
  func.func @transform_3(%arg0: i32, %arg1: i32) -> (i32, i32) {
    %c0_i32 = arith.constant 0 : i32
    %c0_i32_0 = arith.constant 0 : i32
    return %arg1, %c0_i32 : i32, i32
  }
  func.func @transform_4(%arg0: i32, %arg1: i32) -> (i32, i32) {
    %c0_i32 = arith.constant 0 : i32
    %c0_i32_0 = arith.constant 0 : i32
    %c0_i32_1 = arith.constant 0 : i32
    return %c0_i32, %c0_i32_0 : i32, i32
  }
  func.func @transform_5(%arg0: i32, %arg1: i32) -> (i32, i32) {
    %c0_i32 = arith.constant 0 : i32
    %c0_i32_0 = arith.constant 0 : i32
    return %arg0, %c0_i32 : i32, i32
  }
}

module attributes {stable_mosaic.version = 11 : i64} {
  func.func @_mlp_block_kernel(%arg0: i32, %arg1: i32, %arg2: memref<8x128xf32, #tpu.memory_space<vmem>>, %arg3: memref<128x128xbf16, #tpu.memory_space<vmem>>, %arg4: memref<1x128xf32, #tpu.memory_space<vmem>>, %arg5: memref<128x128xbf16, #tpu.memory_space<vmem>>, %arg6: memref<1x128xf32, #tpu.memory_space<vmem>>, %arg7: memref<8x128xf32, #tpu.memory_space<vmem>>, %arg8: memref<8x128xf32, #tpu.memory_space<vmem>>) attributes {dimension_semantics = [#tpu.dimension_semantics<parallel>, #tpu.dimension_semantics<arbitrary>], iteration_bounds = array<i64: 2, 1>, scalar_prefetch = 0 : i64, scratch_operands = 1 : i64, tpu.core_type = #tpu.core_type<tc>, window_params = [{transform_indices = @transform_0, window_bounds = array<i64: 8, 128>}, {transform_indices = @transform_1, window_bounds = array<i64: 128, 128>}, {transform_indices = @transform_2, window_bounds = array<i64: 1, 128>}, {transform_indices = @transform_3, window_bounds = array<i64: 128, 128>}, {pipeline_mode = #tpu.pipeline_mode<synchronous>, transform_indices = @transform_4, window_bounds = array<i64: 1, 128>}, {transform_indices = @transform_5, window_bounds = array<i64: 8, 128>}]} {
    %c0_i32 = arith.constant 0 : i32
    %0 = arith.cmpi eq, %arg1, %c0_i32 : i32
    %1 = arith.extui %0 : i1 to i32
    %c0_i32_0 = arith.constant 0 : i32
    %2 = arith.cmpi ne, %1, %c0_i32_0 : i32
    scf.if %2 {
      %cst_19 = arith.constant 0.000000e+00 : f32
      %32 = vector.broadcast %cst_19 : f32 to vector<8x128xf32>
      %c0_20 = arith.constant 0 : index
      %c0_21 = arith.constant 0 : index
      %33 = vector.load %arg8[%c0_20, %c0_21] : memref<8x128xf32, #tpu.memory_space<vmem>>, vector<8x128xf32>
      tpu.vector_store %arg8[%c0_20, %c0_21], %32 {strides = array<i32>} : memref<8x128xf32, #tpu.memory_space<vmem>>, vector<8x128xf32>,
    } else {
    }
    %c0 = arith.constant 0 : index
    %c0_1 = arith.constant 0 : index
    %3 = vector.load %arg2[%c0, %c0_1] : memref<8x128xf32, #tpu.memory_space<vmem>>, vector<8x128xf32>
    %4 = arith.truncf %3 : vector<8x128xf32> to vector<8x128xbf16>
    %c0_2 = arith.constant 0 : index
    %c0_3 = arith.constant 0 : index
    %5 = vector.load %arg3[%c0_2, %c0_3] : memref<128x128xbf16, #tpu.memory_space<vmem>>, vector<128x128xbf16>
    %cst = arith.constant dense<0.000000e+00> : vector<8x128xf32>
    %6 = tpu.matmul %4, %5, %cst {dimension_numbers = #tpu.dot_dimension_numbers<[1], [0], [0], [1], [0, 0, 1, 1], [], []>} : vector<8x128xbf16>, vector<128x128xbf16>, vector<8x128xf32> -> vector<8x128xf32>
    %c0_4 = arith.constant 0 : index
    %c0_5 = arith.constant 0 : index
    %7 = vector.load %arg4[%c0_4, %c0_5] : memref<1x128xf32, #tpu.memory_space<vmem>>, vector<1x128xf32>
    %8 = vector.broadcast %7 : vector<1x128xf32> to vector<8x128xf32>
    %9 = arith.addf %6, %8 : vector<8x128xf32>
    %cst_6 = arith.constant 5.000000e-01 : f32
    %10 = vector.broadcast %cst_6 : f32 to vector<8x128xf32>
    %11 = arith.mulf %10, %9 : vector<8x128xf32>
    %cst_7 = arith.constant 4.471500e-02 : f32
    %12 = vector.broadcast %cst_7 : f32 to vector<8x128xf32>
    %13 = arith.mulf %12, %9 : vector<8x128xf32>
    %14 = arith.mulf %13, %9 : vector<8x128xf32>
    %15 = arith.mulf %14, %9 : vector<8x128xf32>
    %16 = arith.addf %9, %15 : vector<8x128xf32>
    %cst_8 = arith.constant 0.797884583 : f32
    %17 = vector.broadcast %cst_8 : f32 to vector<8x128xf32>
    %18 = arith.mulf %17, %16 : vector<8x128xf32>
    %19 = math.tanh %18 : vector<8x128xf32>
    %cst_9 = arith.constant 1.000000e+00 : f32
    %20 = vector.broadcast %cst_9 : f32 to vector<8x128xf32>
    %21 = arith.addf %20, %19 : vector<8x128xf32>
    %22 = arith.mulf %11, %21 : vector<8x128xf32>
    %c0_10 = arith.constant 0 : index
    %c0_11 = arith.constant 0 : index
    %23 = vector.load %arg8[%c0_10, %c0_11] : memref<8x128xf32, #tpu.memory_space<vmem>>, vector<8x128xf32>
    %24 = arith.truncf %22 : vector<8x128xf32> to vector<8x128xbf16>
    %c0_12 = arith.constant 0 : index
    %c0_13 = arith.constant 0 : index
    %25 = vector.load %arg5[%c0_12, %c0_13] : memref<128x128xbf16, #tpu.memory_space<vmem>>, vector<128x128xbf16>
    %cst_14 = arith.constant dense<0.000000e+00> : vector<8x128xf32>
    %26 = tpu.matmul %24, %25, %cst_14 {dimension_numbers = #tpu.dot_dimension_numbers<[1], [0], [0], [1], [0, 0, 1, 1], [], []>} : vector<8x128xbf16>, vector<128x128xbf16>, vector<8x128xf32> -> vector<8x128xf32>
    %27 = arith.addf %23, %26 : vector<8x128xf32>
    %c0_15 = arith.constant 0 : index
    %c0_16 = arith.constant 0 : index
    %28 = vector.load %arg8[%c0_15, %c0_16] : memref<8x128xf32, #tpu.memory_space<vmem>>, vector<8x128xf32>
    tpu.vector_store %arg8[%c0_15, %c0_16], %27 {strides = array<i32>} : memref<8x128xf32, #tpu.memory_space<vmem>>, vector<8x128xf32>,
    %c0_i32_17 = arith.constant 0 : i32
    %29 = arith.cmpi eq, %arg1, %c0_i32_17 : i32
    %30 = arith.extui %29 : i1 to i32
    %c0_i32_18 = arith.constant 0 : i32
    %31 = arith.cmpi ne, %30, %c0_i32_18 : i32
    scf.if %31 {
      %c0_19 = arith.constant 0 : index
      %c0_20 = arith.constant 0 : index
      %32 = vector.load %arg8[%c0_19, %c0_20] : memref<8x128xf32, #tpu.memory_space<vmem>>, vector<8x128xf32>
      %c0_21 = arith.constant 0 : index
      %c0_22 = arith.constant 0 : index
      %33 = vector.load %arg6[%c0_21, %c0_22] : memref<1x128xf32, #tpu.memory_space<vmem>>, vector<1x128xf32>
      %34 = vector.broadcast %33 : vector<1x128xf32> to vector<8x128xf32>
      %35 = arith.addf %32, %34 : vector<8x128xf32>
      %c0_23 = arith.constant 0 : index
      %c0_24 = arith.constant 0 : index
      %36 = vector.load %arg7[%c0_23, %c0_24] : memref<8x128xf32, #tpu.memory_space<vmem>>, vector<8x128xf32>
      tpu.vector_store %arg7[%c0_23, %c0_24], %35 {strides = array<i32>} : memref<8x128xf32, #tpu.memory_space<vmem>>, vector<8x128xf32>,
    } else {
    }
    return
  }
  func.func @transform_0(%arg0: i32, %arg1: i32) -> (i32, i32) {
    %c0_i32 = arith.constant 0 : i32
    %c0_i32_0 = arith.constant 0 : i32
    return %arg0, %c0_i32 : i32, i32
  }
  func.func @transform_1(%arg0: i32, %arg1: i32) -> (i32, i32) {
    %c0_i32 = arith.constant 0 : i32
    %c0_i32_0 = arith.constant 0 : i32
    return %c0_i32, %arg1 : i32, i32
  }
  func.func @transform_2(%arg0: i32, %arg1: i32) -> (i32, i32) {
    %c0_i32 = arith.constant 0 : i32
    %c0_i32_0 = arith.constant 0 : i32
    return %c0_i32, %arg1 : i32, i32
  }
  func.func @transform_3(%arg0: i32, %arg1: i32) -> (i32, i32) {
    %c0_i32 = arith.constant 0 : i32
    %c0_i32_0 = arith.constant 0 : i32
    return %arg1, %c0_i32 : i32, i32
  }
  func.func @transform_4(%arg0: i32, %arg1: i32) -> (i32, i32) {
    %c0_i32 = arith.constant 0 : i32
    %c0_i32_0 = arith.constant 0 : i32
    %c0_i32_1 = arith.constant 0 : i32
    return %c0_i32, %c0_i32_0 : i32, i32
  }
  func.func @transform_5(%arg0: i32, %arg1: i32) -> (i32, i32) {
    %c0_i32 = arith.constant 0 : i32
    %c0_i32_0 = arith.constant 0 : i32
    return %arg0, %c0_i32 : i32, i32
  }
}

</mosaic_0001>

<llo_original>
// kernel: tpu_custom_call.1
$region0: #{tpu_custom_call.1}
  #allocation0 [shape = 'u32[]', space=smem, size = 0x4, offset = 0x4, fixed_abs, tag = 'smem constant byte address 0x4 - core index']
  #allocation1 [shape = 'u32[144,128]{1,0:T(1,128)}', space=vmem, size = 0x12000, scoped, tag = 'internal scratch']
  #allocation2 [shape = 'f32[8,128]{1,0:T(8,128)}', space=vmem, size = 0x1000, scoped, tag = 'scratch operand']
  %s0 = inlined_call_operand.hbm [shape: f32[16,128], index: 0, kind: input, shape index: {}]
  %s1 = inlined_call_operand.hbm [shape: bf16[128,128], index: 1, kind: input, shape index: {}]
  %s2 = inlined_call_operand.vmem [shape: f32[1,128], index: 2, kind: input, shape index: {}]
  %s3 = inlined_call_operand.hbm [shape: bf16[128,128], index: 3, kind: input, shape index: {}]
  %s4 = inlined_call_operand.vmem [shape: f32[1,128], index: 4, kind: input, shape index: {}]
  %s5 = inlined_call_operand.hbm [shape: f32[16,128], index: 5, kind: output, shape index: {}]
  %s6 = sld [smem:[#allocation0]]
  $region73: #{tpu_custom_call.1} parent=0
    _
  %s8 = ssub.s32 1, %s6
  %s9 = scalar_select 0, %s8, %s6
  $region1: #{tpu_custom_call.1} parent=0
    #allocation3 [shape = 'u8[8192]{0}', space=vmem, size = 0x2000, scoped, tag = 'input window, operand 0']
    #allocation4 [shape = 's32[2]{0}', space=sflag, size = 0x8, scoped, tag = 'scoped memory for tpu_custom_call.1']
    #allocation5 [shape = 's32[2]{0}', space=sflag, size = 0x8, scoped, tag = 'scoped memory for tpu_custom_call.1']
    #allocation6 [shape = 'u8[32768]{0}', space=vmem, size = 0x8000, scoped, tag = 'input window, operand 1, single buffered']
    #allocation7 [shape = 's32[1]{0}', space=sflag, size = 0x4, scoped, tag = 'scoped memory for tpu_custom_call.1']
    #allocation8 [shape = 'u8[32768]{0}', space=vmem, size = 0x8000, scoped, tag = 'input window, operand 3, single buffered']
    #allocation9 [shape = 'u8[8192]{0}', space=vmem, size = 0x2000, scoped, tag = 'output window, operand 0']
    %10 = vsyncpa [#allocation4], 0
    %s11 = scalar_lea.sflag [#allocation4], 1
    %12 = vsyncpa %s11, 0
    %13 = vsyncpa [#allocation7], 0
    %14 = vsyncpa [#allocation5], 0
    %s15 = scalar_lea.sflag [#allocation5], 1
    %16 = vsyncpa %s15, 0
    loop: start=0, step=1, limit=4
    $region2: #{tpu_custom_call.1} parent=1 // loop_pre_header
      _
    $region3: #{tpu_custom_call.1} parent=1 // loop_header
      %s18 = sphi 0, %s22
      %p19 = scmp.ge.s32.totalorder %s18, 4
      %s25 = sphi 0, %s37
      %s26 = sphi 0, %s33
      %s27 = sphi 0, %s25
      %s28 = sphi 0, %s26
      %s29 = sphi 0, %s27
      %s30 = sphi 0, %s28
      %s40 = sphi 0, %s42
      %s43 = sphi 0, %s40
      %s44 = sphi 0, %s43
      %s60 = sphi 0, %s44
      %s66 = sphi 0, %s68
      %s69 = sphi 0, %s66
      %s70 = sphi 0, %s69
      %s86 = sphi 0, %s70
      %s92 = sphi 0, %s94
      %s95 = sphi 0, %s92
      %s96 = sphi 0, %s95
      %s112 = sphi 0, %s96
      %s118 = sphi 0, %s120
      %s121 = sphi 0, %s118
      %s122 = sphi 0, %s121
      %s138 = sphi 0, %s122
      %s142 = sphi 0, %s142
      %s144 = sphi 0, %s142
      %s145 = sphi 0, %s144
      %s159 = sphi 0, %s145
      %s165 = sphi 0, %s167
      %s168 = sphi 0, %s165
      %s169 = sphi 0, %s168
      %s185 = sphi 0, %s169
    $region4: #{tpu_custom_call.1} parent=1 // loop_header_branch
      %21 = sbr.rel (%p19) target = $region8
    $region5: #{tpu_custom_call.1} parent=1 // loop_body
      %s23 = ssub.s32 %s18, 1
      %s24 = ssub.s32 %s18, 2
      %s31 = sadd.s32 1, %s26
      %p32 = scmp.ge.s32.totalorder %s31, 1
      %s33 = scalar_select %p32, 0, %s31
      %s34 = sadd.s32 1, %s25
      %s35 = scalar_select %p32, %s34, %s25
      %p36 = scmp.ge.s32.totalorder %s35, 2
      %s37 = scalar_select %p36, 0, %s35
      %s38 = ssub.s32 %s25, %s37
      %p39 = scmp.eq.s32.totalorder %s38, 0
      %s41 = sadd.s32 %s40, 1
      %s42 = scalar_select %p39, %s40, %s41
      %p45 = pneg %p39
      %p46 = scmp.eq.s32.totalorder %s18, 1
      %p47 = por %p45, %p46
      %p48 = scmp.ne.s32.totalorder %s40, %s43
      %p49 = scmp.eq.s32.totalorder %s18, 0
      %p50 = por %p48, %p49
      %p51 = scmp.ne.s32.totalorder %s40, %s43
      %p52 = scmp.eq.s32.totalorder %s23, 1
      %p53 = por %p51, %p52
      %p54 = scmp.ne.s32.totalorder %s43, %s44
      %p55 = scmp.eq.s32.totalorder %s23, 0
      %p56 = por %p54, %p55
      %p57 = scmp.ne.s32.totalorder %s43, %s44
      %p58 = scmp.eq.s32.totalorder %s24, 1
      %p59 = por %p57, %p58
      %p61 = scmp.ne.s32.totalorder %s44, %s60
      %p62 = scmp.eq.s32.totalorder %s24, 0
      %p63 = por %p61, %p62
      %s64 = ssub.s32 %s26, %s33
      %p65 = scmp.eq.s32.totalorder %s64, 0
      %s67 = sadd.s32 %s66, 1
      %s68 = scalar_select %p65, %s66, %s67
      %p71 = pneg %p65
      %p72 = scmp.eq.s32.totalorder %s18, 1
      %p73 = por %p71, %p72
      %p74 = scmp.ne.s32.totalorder %s66, %s69
      %p75 = scmp.eq.s32.totalorder %s18, 0
      %p76 = por %p74, %p75
      %p77 = scmp.ne.s32.totalorder %s66, %s69
      %p78 = scmp.eq.s32.totalorder %s23, 1
      %p79 = por %p77, %p78
      %p80 = scmp.ne.s32.totalorder %s69, %s70
      %p81 = scmp.eq.s32.totalorder %s23, 0
      %p82 = por %p80, %p81
      %p83 = scmp.ne.s32.totalorder %s69, %s70
      %p84 = scmp.eq.s32.totalorder %s24, 1
      %p85 = por %p83, %p84
      %p87 = scmp.ne.s32.totalorder %s70, %s86
      %p88 = scmp.eq.s32.totalorder %s24, 0
      %p89 = por %p87, %p88
      %s90 = ssub.s32 %s26, %s33
      %p91 = scmp.eq.s32.totalorder %s90, 0
      %s93 = sadd.s32 %s92, 1
      %s94 = scalar_select %p91, %s92, %s93
      %p97 = pneg %p91
      %p98 = scmp.eq.s32.totalorder %s18, 1
      %p99 = por %p97, %p98
      %p100 = scmp.ne.s32.totalorder %s92, %s95
      %p101 = scmp.eq.s32.totalorder %s18, 0
      %p102 = por %p100, %p101
      %p103 = scmp.ne.s32.totalorder %s92, %s95
      %p104 = scmp.eq.s32.totalorder %s23, 1
      %p105 = por %p103, %p104
      %p106 = scmp.ne.s32.totalorder %s95, %s96
      %p107 = scmp.eq.s32.totalorder %s23, 0
      %p108 = por %p106, %p107
      %p109 = scmp.ne.s32.totalorder %s95, %s96
      %p110 = scmp.eq.s32.totalorder %s24, 1
      %p111 = por %p109, %p110
      %p113 = scmp.ne.s32.totalorder %s96, %s112
      %p114 = scmp.eq.s32.totalorder %s24, 0
      %p115 = por %p113, %p114
      %s116 = ssub.s32 %s26, %s33
      %p117 = scmp.eq.s32.totalorder %s116, 0
      %s119 = sadd.s32 %s118, 1
      %s120 = scalar_select %p117, %s118, %s119
      %p123 = pneg %p117
      %p124 = scmp.eq.s32.totalorder %s18, 1
      %p125 = por %p123, %p124
      %p126 = scmp.ne.s32.totalorder %s118, %s121
      %p127 = scmp.eq.s32.totalorder %s18, 0
      %p128 = por %p126, %p127
      %p129 = scmp.ne.s32.totalorder %s118, %s121
      %p130 = scmp.eq.s32.totalorder %s23, 1
      %p131 = por %p129, %p130
      %p132 = scmp.ne.s32.totalorder %s121, %s122
      %p133 = scmp.eq.s32.totalorder %s23, 0
      %p134 = por %p132, %p133
      %p135 = scmp.ne.s32.totalorder %s121, %s122
      %p136 = scmp.eq.s32.totalorder %s24, 1
      %p137 = por %p135, %p136
      %p139 = scmp.ne.s32.totalorder %s122, %s138
      %p140 = scmp.eq.s32.totalorder %s24, 0
      %p141 = por %p139, %p140
      %s143 = sadd.s32 %s142, 1
      %p146 = scmp.eq.s32.totalorder %s18, 1
      %p147 = scmp.ne.s32.totalorder %s142, %s144
      %p148 = scmp.eq.s32.totalorder %s18, 0
      %p149 = por %p147, %p148
      %p150 = scmp.ne.s32.totalorder %s142, %s144
      %p151 = scmp.eq.s32.totalorder %s23, 1
      %p152 = por %p150, %p151
      %p153 = scmp.ne.s32.totalorder %s144, %s145
      %p154 = scmp.eq.s32.totalorder %s23, 0
      %p155 = por %p153, %p154
      %p156 = scmp.ne.s32.totalorder %s144, %s145
      %p157 = scmp.eq.s32.totalorder %s24, 1
      %p158 = por %p156, %p157
      %p160 = scmp.ne.s32.totalorder %s145, %s159
      %p161 = scmp.eq.s32.totalorder %s24, 0
      %p162 = por %p160, %p161
      %s163 = ssub.s32 %s25, %s37
      %p164 = scmp.eq.s32.totalorder %s163, 0
      %s166 = sadd.s32 %s165, 1
      %s167 = scalar_select %p164, %s165, %s166
      %p170 = pneg %p164
      %p171 = scmp.eq.s32.totalorder %s18, 1
      %p172 = por %p170, %p171
      %p173 = scmp.ne.s32.totalorder %s165, %s168
      %p174 = scmp.eq.s32.totalorder %s18, 0
      %p175 = por %p173, %p174
      %p176 = scmp.ne.s32.totalorder %s165, %s168
      %p177 = scmp.eq.s32.totalorder %s23, 1
      %p178 = por %p176, %p177
      %p179 = scmp.ne.s32.totalorder %s168, %s169
      %p180 = scmp.eq.s32.totalorder %s23, 0
      %p181 = por %p179, %p180
      %p182 = scmp.ne.s32.totalorder %s168, %s169
      %p183 = scmp.eq.s32.totalorder %s24, 1
      %p184 = por %p182, %p183
      %p186 = scmp.ne.s32.totalorder %s169, %s185
      %p187 = scmp.eq.s32.totalorder %s24, 0
      %p188 = por %p186, %p187
      %p189 = scmp.le.s32.totalorder 1, %s18
      %p190 = scmp.lt.s32.totalorder %s18, 3
      %p191 = pnand %p189, %p190
      %p192 = pneg %p191
      // Predicated region
      $region9: #{tpu_custom_call.1} parent=5 // pred_check
        _
      $region10: #{tpu_custom_call.1} parent=5 // pred_check_branch
        %194 = sbr.rel (%p191) target = $region12
      $region11: #{tpu_custom_call.1} parent=5 // pred_region
        %s195 = ssub.s32 %s18, 1
        // Predicated region
        $region13: #{tpu_custom_call.1} parent=11 // pred_check
          %p196 = pneg %p82
        $region14: #{tpu_custom_call.1} parent=11 // pred_check_branch
          %198 = sbr.rel (%p196) target = $region16
        $region15: #{tpu_custom_call.1} parent=11 // pred_region
          %s200 = ssub.s32 1024, 1024
          %201 = vsyncadd [#allocation7], %s200
          %s202 = smul.addr %s28, 64
          %s203 = scalar_lea.hbm %s1, %s202
          %s204 = sshll.u32 [#allocation6], 4
          %s205 = int_to_ptr.vmem [resolvable:$true] %s204
          %210 = dma.hbm_to_vmem [thread:$0]  %s203, 1024, %s205, [#allocation7], 64, 64, 4
        $region16: #{tpu_custom_call.1} parent=11 // pred_fallthru
          _
        // Predicated region
        $region17: #{tpu_custom_call.1} parent=11 // pred_check
          %p211 = pneg %p108
        $region18: #{tpu_custom_call.1} parent=11 // pred_check_branch
          %213 = sbr.rel (%p211) target = $region20
        $region19: #{tpu_custom_call.1} parent=11 // pred_region
          %p214 = scmp.lt.s32.totalorder %s28, 0
          %s215 = scalar_select %p214, %s28, 0
          %s216 = scalar_lea.vmem %s2, %s215
        $region20: #{tpu_custom_call.1} parent=11 // pred_fallthru
          _
        // Predicated region
        $region21: #{tpu_custom_call.1} parent=11 // pred_check
          %p217 = pneg %p134
        $region22: #{tpu_custom_call.1} parent=11 // pred_check_branch
          %219 = sbr.rel (%p217) target = $region24
        $region23: #{tpu_custom_call.1} parent=11 // pred_region
          %s220 = smul.u32 16, %s28
          %s222 = ssub.s32 1024, 1024
          %223 = vsyncadd [#allocation7], %s222
          %s224 = smul.addr %s220, 64
          %s225 = scalar_lea.hbm %s3, %s224
          %s226 = sshll.u32 [#allocation8], 4
          %s227 = int_to_ptr.vmem [resolvable:$true] %s226
          %232 = dma.hbm_to_vmem [thread:$0]  %s225, 1024, %s227, [#allocation7], 64, 64, 4
        $region24: #{tpu_custom_call.1} parent=11 // pred_fallthru
          _
        // Predicated region
        $region25: #{tpu_custom_call.1} parent=11 // pred_check
          %p233 = pneg %p155
        $region26: #{tpu_custom_call.1} parent=11 // pred_check_branch
          %235 = sbr.rel (%p233) target = $region28
        $region27: #{tpu_custom_call.1} parent=11 // pred_region
          _
        $region28: #{tpu_custom_call.1} parent=11 // pred_fallthru
          _
      $region12: #{tpu_custom_call.1} parent=5 // pred_fallthru
        _
      %p236 = scmp.lt.s32.totalorder %s18, 2
      // Predicated region
      $region29: #{tpu_custom_call.1} parent=5 // pred_check
        %p237 = pneg %p236
      $region30: #{tpu_custom_call.1} parent=5 // pred_check_branch
        %239 = sbr.rel (%p237) target = $region32
      $region31: #{tpu_custom_call.1} parent=5 // pred_region
        // Predicated region
        $region33: #{tpu_custom_call.1} parent=31 // pred_check
          %p240 = pneg %p50
        $region34: #{tpu_custom_call.1} parent=31 // pred_check_branch
          %242 = sbr.rel (%p240) target = $region36
        $region35: #{tpu_custom_call.1} parent=31 // pred_region
          %s243 = sand.u32 %s40, 1
          %s244 = scalar_lea.sflag [#allocation4], %s243
          %s245 = sand.u32 %s40, 1
          %s246 = smul.addr %s245, 8
          %s247 = scalar_lea.vmem [#allocation3], %s246
          %s249 = ssub.s32 128, 128
          %250 = vsyncadd %s244, %s249
          %s251 = smul.addr %s25, 128
          %s252 = scalar_lea.hbm %s0, %s251
          %s254 = sshll.u32 %s247, 4
          %s255 = int_to_ptr.vmem [resolvable:$true] %s254
          %257 = dma.hbm_to_vmem [thread:$0]  %s252, 128, %s255, %s244
        $region36: #{tpu_custom_call.1} parent=31 // pred_fallthru
          _
      $region32: #{tpu_custom_call.1} parent=5 // pred_fallthru
        _
      %p258 = scmp.le.s32.totalorder 1, %s18
      %p259 = scmp.lt.s32.totalorder %s18, 3
      %p260 = pnand %p258, %p259
      %p261 = pneg %p260
      // Predicated region
      $region37: #{tpu_custom_call.1} parent=5 // pred_check
        _
      $region38: #{tpu_custom_call.1} parent=5 // pred_check_branch
        %263 = sbr.rel (%p260) target = $region40
      $region39: #{tpu_custom_call.1} parent=5 // pred_region
        %s264 = ssub.s32 %s18, 1
        %s265 = sand.u32 %s43, 1
        %s266 = scalar_lea.sflag [#allocation4], %s265
        %s267 = sand.u32 %s43, 1
        %s268 = smul.addr %s267, 8
        %s269 = scalar_lea.vmem [#allocation3], %s268
        // Predicated region
        $region41: #{tpu_custom_call.1} parent=39 // pred_check
          %p270 = pneg %p56
        $region42: #{tpu_custom_call.1} parent=39 // pred_check_branch
          %272 = sbr.rel (%p270) target = $region44
        $region43: #{tpu_custom_call.1} parent=39 // pred_region
          %273 = dma.done %s266, 128
        $region44: #{tpu_custom_call.1} parent=39 // pred_fallthru
          _
        // Predicated region
        $region45: #{tpu_custom_call.1} parent=39 // pred_check
          %p274 = pneg %p82
        $region46: #{tpu_custom_call.1} parent=39 // pred_check_branch
          %276 = sbr.rel (%p274) target = $region48
        $region47: #{tpu_custom_call.1} parent=39 // pred_region
          %277 = dma.done [#allocation7], 1024
        $region48: #{tpu_custom_call.1} parent=39 // pred_fallthru
          _
        // Predicated region
        $region49: #{tpu_custom_call.1} parent=39 // pred_check
          %p278 = pneg %p134
        $region50: #{tpu_custom_call.1} parent=39 // pred_check_branch
          %280 = sbr.rel (%p278) target = $region52
        $region51: #{tpu_custom_call.1} parent=39 // pred_region
          %281 = dma.done [#allocation7], 1024
        $region52: #{tpu_custom_call.1} parent=39 // pred_fallthru
          _
        %s282 = sand.u32 %s43, 1
        %s283 = scalar_lea.sflag [#allocation4], %s282
        %s284 = sand.u32 %s43, 1
        %s285 = smul.addr %s284, 8
        %s286 = scalar_lea.vmem [#allocation3], %s285
        %p287 = pneg %p56
        %p288 = pneg %p53
        %p289 = pneg %p82
        %p290 = pneg %p79
        %p291 = scmp.lt.s32.totalorder %s28, 0
        %s292 = scalar_select %p291, %s28, 0
        %s293 = scalar_lea.vmem %s2, %s292
        %p294 = pneg %p108
        %p295 = pneg %p105
        %p296 = pneg %p134
        %p297 = pneg %p131
        %p298 = pneg %p155
        %p299 = pneg %p152
        %p300 = pneg %p181
        %p301 = pneg %p178
        %s302 = sand.u32 %s168, 1
        %s303 = scalar_lea.sflag [#allocation5], %s302
        %s304 = sand.u32 %s168, 1
        %s305 = smul.addr %s304, 8
        %s306 = scalar_lea.vmem [#allocation9], %s305
        %p307 = scmp.lt.s32.totalorder %s28, 0
        %s308 = scalar_select %p307, %s28, 0
        %s309 = scalar_lea.vmem %s2, %s308
        %s310 = smul.u32 16, %s28
        %p312 = scmp.eq.s32.totalorder %s28, 0
        // Predicated region
        $region53: #{tpu_custom_call.1} parent=39 // pred_check
          %p313 = pneg %p312
        $region54: #{tpu_custom_call.1} parent=39 // pred_check_branch
          %315 = sbr.rel (%p313) target = $region56
        $region55: #{tpu_custom_call.1} parent=39 // pred_region
          %316 = vst [vmem:[#allocation2] sm:$0xff] 0.0
        $region56: #{tpu_custom_call.1} parent=39 // pred_fallthru
          _
        %v317 = vld [vmem:[%s269] sm:$0xff]
        %v318 = vpack.c.bf16 %v317, %v317
        %v319 = vld [vmem:[#allocation6] sm:$0xf]
        %v320 = vld [vmem:[#allocation6 + $0x4] sm:$0xf]
        %v321 = vld [vmem:[#allocation6 + $0x8] sm:$0xf]
        %v322 = vld [vmem:[#allocation6 + $0xc] sm:$0xf]
        %v323 = vld [vmem:[#allocation6 + $0x10] sm:$0xf]
        %v324 = vld [vmem:[#allocation6 + $0x14] sm:$0xf]
        %v325 = vld [vmem:[#allocation6 + $0x18] sm:$0xf]
        %v326 = vld [vmem:[#allocation6 + $0x1c] sm:$0xf]
        %v327 = vld [vmem:[#allocation6 + $0x20] sm:$0xf]
        %v328 = vld [vmem:[#allocation6 + $0x24] sm:$0xf]
        %v329 = vld [vmem:[#allocation6 + $0x28] sm:$0xf]
        %v330 = vld [vmem:[#allocation6 + $0x2c] sm:$0xf]
        %v331 = vld [vmem:[#allocation6 + $0x30] sm:$0xf]
        %v332 = vld [vmem:[#allocation6 + $0x34] sm:$0xf]
        %v333 = vld [vmem:[#allocation6 + $0x38] sm:$0xf]
        %v334 = vld [vmem:[#allocation6 + $0x3c] sm:$0xf]
        %v335 = vld [vmem:[%s309] sm:$0x1]
        %v337 = vlaneseq
        %v338 = vshrl.u32 %v337, 7
        %v339 = vsub.s32 0, %v338
        %v340 = vrot.slane %v335, %v339
        %v358 = vunpack.c.l.b16 %v319
        %v359 = vunpack.c.l.b16 %v320
        %v360 = vunpack.c.l.b16 %v321
        %v361 = vunpack.c.l.b16 %v322
        %v362 = vunpack.c.l.b16 %v323
        %v363 = vunpack.c.l.b16 %v324
        %v364 = vunpack.c.l.b16 %v325
        %v365 = vunpack.c.l.b16 %v326
        %v366 = vunpack.c.l.b16 %v327
        %v367 = vunpack.c.l.b16 %v328
        %v368 = vunpack.c.l.b16 %v329
        %v369 = vunpack.c.l.b16 %v330
        %v370 = vunpack.c.l.b16 %v331
        %v371 = vunpack.c.l.b16 %v332
        %v372 = vunpack.c.l.b16 %v333
        %v373 = vunpack.c.l.b16 %v334
        %v374 = vpack.c.b16 %v359, %v358
        %v375 = vpack.c.b16 %v361, %v360
        %v376 = vpack.c.b16 %v363, %v362
        %v377 = vpack.c.b16 %v365, %v364
        %v378 = vpack.c.b16 %v367, %v366
        %v379 = vpack.c.b16 %v369, %v368
        %v380 = vpack.c.b16 %v371, %v370
        %v381 = vpack.c.b16 %v373, %v372
        %390 = vmatprep.subr.bf16.mxu0 0
        %391 = vmatpush1.bf16.msra.mxu0 %v381
        %392 = vmatprep.subr.bf16.mxu0 0
        %393 = vmatpush1.bf16.msra.mxu0 %v380
        %394 = vmatprep.subr.bf16.mxu0 0
        %395 = vmatpush1.bf16.msra.mxu0 %v379
        %396 = vmatprep.subr.bf16.mxu0 0
        %397 = vmatpush1.bf16.msra.mxu0 %v378
        %398 = vmatprep.subr.bf16.mxu0 0
        %399 = vmatpush1.bf16.msra.mxu0 %v377
        %400 = vmatprep.subr.bf16.mxu0 0
        %401 = vmatpush1.bf16.msra.mxu0 %v376
        %402 = vmatprep.subr.bf16.mxu0 0
        %403 = vmatpush1.bf16.msra.mxu0 %v375
        %404 = vmatprep.subr.bf16.mxu0 0
        %405 = vmatpush1.bf16.msra.mxu0 %v374
        %406 = vmatprep.subr.bf16.mxu0 0
        %407 = vmatpush2.bf16.msra.mxu0 0
        %408 = vmatprep.subr.bf16.mxu0 0
        %409 = vmatpush2.bf16.msra.mxu0 0
        %410 = vmatprep.subr.bf16.mxu0 0
        %411 = vmatpush2.bf16.msra.mxu0 0
        %412 = vmatprep.subr.bf16.mxu0 0
        %413 = vmatpush2.bf16.msra.mxu0 0
        %414 = vmatprep.subr.bf16.mxu0 0
        %415 = vmatpush2.bf16.msra.mxu0 0
        %416 = vmatprep.subr.bf16.mxu0 0
        %417 = vmatpush2.bf16.msra.mxu0 0
        %418 = vmatprep.subr.bf16.mxu0 0
        %419 = vmatpush2.bf16.msra.mxu0 0
        %420 = vmatprep.subr.bf16.mxu0 0
        %421 = vmatpush2.bf16.msra.mxu0 0
        %422 = vmatprep.mubr.bf16.mxu0 0
        %423 = vmatmul.mubr.bf16.gmra.mxu0 %v318
        %v424 = vpop.f32.mrf.mxu0
        %v425 = vadd.f32 %v340, %v424
        %v426 = vpop.f32.mrf.mxu0
        %v427 = vpop.f32.mrf.mxu0
        %v428 = vpop.f32.mrf.mxu0
        %429 = vdwg.mxu0
        %v430 = vmul.f32 %v425, 0.5
        %v431 = vmul.f32 %v425, 0.044715
        %v432 = vmul.f32 %v431, %v425
        %v433 = vmul.f32 %v432, %v425
        %v434 = vadd.f32 %v425, %v433
        %v435 = vmul.f32 %v434, 0.7978846
        %v436 = vtanh.pop %v435
        %v437 = vadd.f32 %v436, 1.0
        %v438 = vmul.f32 %v430, %v437
        %v439 = vld [vmem:[#allocation2] sm:$0xff]
        %v440 = vpack.c.bf16 %v438, %v438
        %v441 = vld [vmem:[#allocation8] sm:$0xf]
        %v442 = vld [vmem:[#allocation8 + $0x4] sm:$0xf]
        %v443 = vld [vmem:[#allocation8 + $0x8] sm:$0xf]
        %v444 = vld [vmem:[#allocation8 + $0xc] sm:$0xf]
        %v445 = vld [vmem:[#allocation8 + $0x10] sm:$0xf]
        %v446 = vld [vmem:[#allocation8 + $0x14] sm:$0xf]
        %v447 = vld [vmem:[#allocation8 + $0x18] sm:$0xf]
        %v448 = vld [vmem:[#allocation8 + $0x1c] sm:$0xf]
        %v449 = vld [vmem:[#allocation8 + $0x20] sm:$0xf]
        %v450 = vld [vmem:[#allocation8 + $0x24] sm:$0xf]
        %v451 = vld [vmem:[#allocation8 + $0x28] sm:$0xf]
        %v452 = vld [vmem:[#allocation8 + $0x2c] sm:$0xf]
        %v453 = vld [vmem:[#allocation8 + $0x30] sm:$0xf]
        %v454 = vld [vmem:[#allocation8 + $0x34] sm:$0xf]
        %v455 = vld [vmem:[#allocation8 + $0x38] sm:$0xf]
        %v456 = vld [vmem:[#allocation8 + $0x3c] sm:$0xf]
        %v473 = vunpack.c.l.b16 %v441
        %v474 = vunpack.c.l.b16 %v442
        %v475 = vunpack.c.l.b16 %v443
        %v476 = vunpack.c.l.b16 %v444
        %v477 = vunpack.c.l.b16 %v445
        %v478 = vunpack.c.l.b16 %v446
        %v479 = vunpack.c.l.b16 %v447
        %v480 = vunpack.c.l.b16 %v448
        %v481 = vunpack.c.l.b16 %v449
        %v482 = vunpack.c.l.b16 %v450
        %v483 = vunpack.c.l.b16 %v451
        %v484 = vunpack.c.l.b16 %v452
        %v485 = vunpack.c.l.b16 %v453
        %v486 = vunpack.c.l.b16 %v454
        %v487 = vunpack.c.l.b16 %v455
        %v488 = vunpack.c.l.b16 %v456
        %v489 = vpack.c.b16 %v474, %v473
        %v490 = vpack.c.b16 %v476, %v475
        %v491 = vpack.c.b16 %v478, %v477
        %v492 = vpack.c.b16 %v480, %v479
        %v493 = vpack.c.b16 %v482, %v481
        %v494 = vpack.c.b16 %v484, %v483
        %v495 = vpack.c.b16 %v486, %v485
        %v496 = vpack.c.b16 %v488, %v487
        %505 = vmatprep.subr.bf16.mxu0 0
        %506 = vmatpush1.bf16.msra.mxu0 %v496
        %507 = vmatprep.subr.bf16.mxu0 0
        %508 = vmatpush1.bf16.msra.mxu0 %v495
        %509 = vmatprep.subr.bf16.mxu0 0
        %510 = vmatpush1.bf16.msra.mxu0 %v494
        %511 = vmatprep.subr.bf16.mxu0 0
        %512 = vmatpush1.bf16.msra.mxu0 %v493
        %513 = vmatprep.subr.bf16.mxu0 0
        %514 = vmatpush1.bf16.msra.mxu0 %v492
        %515 = vmatprep.subr.bf16.mxu0 0
        %516 = vmatpush1.bf16.msra.mxu0 %v491
        %517 = vmatprep.subr.bf16.mxu0 0
        %518 = vmatpush1.bf16.msra.mxu0 %v490
        %519 = vmatprep.subr.bf16.mxu0 0
        %520 = vmatpush1.bf16.msra.mxu0 %v489
        %521 = vmatprep.subr.bf16.mxu0 0
        %522 = vmatpush2.bf16.msra.mxu0 0
        %523 = vmatprep.subr.bf16.mxu0 0
        %524 = vmatpush2.bf16.msra.mxu0 0
        %525 = vmatprep.subr.bf16.mxu0 0
        %526 = vmatpush2.bf16.msra.mxu0 0
        %527 = vmatprep.subr.bf16.mxu0 0
        %528 = vmatpush2.bf16.msra.mxu0 0
        %529 = vmatprep.subr.bf16.mxu0 0
        %530 = vmatpush2.bf16.msra.mxu0 0
        %531 = vmatprep.subr.bf16.mxu0 0
        %532 = vmatpush2.bf16.msra.mxu0 0
        %533 = vmatprep.subr.bf16.mxu0 0
        %534 = vmatpush2.bf16.msra.mxu0 0
        %535 = vmatprep.subr.bf16.mxu0 0
        %536 = vmatpush2.bf16.msra.mxu0 0
        %537 = vmatprep.mubr.bf16.mxu0 0
        %538 = vmatmul.mubr.bf16.gmra.mxu0 %v440
        %v539 = vpop.f32.mrf.mxu0
        %v540 = vadd.f32 0.0, %v539
        %v541 = vpop.f32.mrf.mxu0
        %v542 = vpop.f32.mrf.mxu0
        %v543 = vpop.f32.mrf.mxu0
        %544 = vdwg.mxu0
        %v545 = vadd.f32 %v439, %v540
        %546 = vst [vmem:[#allocation2] sm:$0xff] %v545
        // Predicated region
        $region57: #{tpu_custom_call.1} parent=39 // pred_check
          %p547 = pneg %p312
        $region58: #{tpu_custom_call.1} parent=39 // pred_check_branch
          %549 = sbr.rel (%p547) target = $region60
        $region59: #{tpu_custom_call.1} parent=39 // pred_region
          %v550 = vld [vmem:[#allocation2] sm:$0xff]
          %v551 = vld [vmem:[%s4] sm:$0x1]
          %v553 = vlaneseq
          %v554 = vshrl.u32 %v553, 7
          %v555 = vsub.s32 0, %v554
          %v556 = vrot.slane %v551, %v555
          %v558 = vadd.f32 %v550, %v556
          %559 = vst [vmem:[%s306] sm:$0xff] %v558
        $region60: #{tpu_custom_call.1} parent=39 // pred_fallthru
          _
        %s560 = sand.u32 %s168, 1
        %s561 = scalar_lea.sflag [#allocation5], %s560
        %s562 = sand.u32 %s168, 1
        %s563 = smul.addr %s562, 8
        %s564 = scalar_lea.vmem [#allocation9], %s563
        // Predicated region
        $region61: #{tpu_custom_call.1} parent=39 // pred_check
          %p565 = pneg %p178
        $region62: #{tpu_custom_call.1} parent=39 // pred_check_branch
          %567 = sbr.rel (%p565) target = $region64
        $region63: #{tpu_custom_call.1} parent=39 // pred_region
          %s569 = ssub.s32 128, 128
          %570 = vsyncadd %s561, %s569
          %s571 = smul.addr %s27, 128
          %s572 = scalar_lea.hbm %s5, %s571
          %s574 = sshll.u32 %s564, 4
          %s575 = int_to_ptr.vmem [resolvable:$true] %s574
          %577 = dma.vmem_to_hbm [thread:$0]  %s575, 128, %s572, %s561
        $region64: #{tpu_custom_call.1} parent=39 // pred_fallthru
          _
      $region40: #{tpu_custom_call.1} parent=5 // pred_fallthru
        _
      %p578 = scmp.le.s32.totalorder 2, %s18
      // Predicated region
      $region65: #{tpu_custom_call.1} parent=5 // pred_check
        %p579 = pneg %p578
      $region66: #{tpu_custom_call.1} parent=5 // pred_check_branch
        %581 = sbr.rel (%p579) target = $region68
      $region67: #{tpu_custom_call.1} parent=5 // pred_region
        %s582 = ssub.s32 %s18, 2
        // Predicated region
        $region69: #{tpu_custom_call.1} parent=67 // pred_check
          %p583 = pneg %p184
        $region70: #{tpu_custom_call.1} parent=67 // pred_check_branch
          %585 = sbr.rel (%p583) target = $region72
        $region71: #{tpu_custom_call.1} parent=67 // pred_region
          %s586 = sand.u32 %s169, 1
          %s587 = scalar_lea.sflag [#allocation5], %s586
          %s588 = sand.u32 %s169, 1
          %s589 = smul.addr %s588, 8
          %s590 = scalar_lea.vmem [#allocation9], %s589
          %591 = dma.done %s587, 128
        $region72: #{tpu_custom_call.1} parent=67 // pred_fallthru
          _
      $region68: #{tpu_custom_call.1} parent=5 // pred_fallthru
        _
    $region6: #{tpu_custom_call.1} parent=1 // loop_footer
      %s22 = sadd.s32 1, %s18
    $region7: #{tpu_custom_call.1} parent=1 // loop_footer_branch
      %17 = sbr.rel target = $region3
    $region8: #{tpu_custom_call.1} parent=1 // loop_exit
      _
    %592 = vsyncpa [#allocation4], 1
    %s593 = scalar_lea.sflag [#allocation4], 1
    %594 = vsyncpa %s593, 1
    %595 = vsyncpa [#allocation7], 1
    %596 = vsyncpa [#allocation5], 1
    %s597 = scalar_lea.sflag [#allocation5], 1
    %598 = vsyncpa %s597, 1

// kernel: tpu_custom_call.1
$region0: #{tpu_custom_call.1}
  #allocation0 [shape = 'u32[]', space=smem, size = 0x4, offset = 0x4, fixed_abs, tag = 'smem constant byte address 0x4 - core index']
  #allocation1 [shape = 'u32[144,128]{1,0:T(1,128)}', space=vmem, size = 0x12000, scoped, tag = 'internal scratch']
  #allocation2 [shape = 'f32[8,128]{1,0:T(8,128)}', space=vmem, size = 0x1000, scoped, tag = 'scratch operand']
  %s0 = inlined_call_operand.hbm [shape: f32[16,128], index: 0, kind: input, shape index: {}]
  %s1 = inlined_call_operand.hbm [shape: bf16[128,128], index: 1, kind: input, shape index: {}]
  %s2 = inlined_call_operand.vmem [shape: f32[1,128], index: 2, kind: input, shape index: {}]
  %s3 = inlined_call_operand.hbm [shape: bf16[128,128], index: 3, kind: input, shape index: {}]
  %s4 = inlined_call_operand.vmem [shape: f32[1,128], index: 4, kind: input, shape index: {}]
  %s5 = inlined_call_operand.hbm [shape: f32[16,128], index: 5, kind: output, shape index: {}]
  %s6 = sld [smem:[#allocation0]]
  $region73: #{tpu_custom_call.1} parent=0
    _
  %s8 = ssub.s32 1, %s6
  %s9 = scalar_select 0, %s8, %s6
  $region1: #{tpu_custom_call.1} parent=0
    #allocation3 [shape = 'u8[8192]{0}', space=vmem, size = 0x2000, scoped, tag = 'input window, operand 0']
    #allocation4 [shape = 's32[2]{0}', space=sflag, size = 0x8, scoped, tag = 'scoped memory for tpu_custom_call.1']
    #allocation5 [shape = 's32[2]{0}', space=sflag, size = 0x8, scoped, tag = 'scoped memory for tpu_custom_call.1']
    #allocation6 [shape = 'u8[32768]{0}', space=vmem, size = 0x8000, scoped, tag = 'input window, operand 1, single buffered']
    #allocation7 [shape = 's32[1]{0}', space=sflag, size = 0x4, scoped, tag = 'scoped memory for tpu_custom_call.1']
    #allocation8 [shape = 'u8[32768]{0}', space=vmem, size = 0x8000, scoped, tag = 'input window, operand 3, single buffered']
    #allocation9 [shape = 'u8[8192]{0}', space=vmem, size = 0x2000, scoped, tag = 'output window, operand 0']
    %10 = vsyncpa [#allocation4], 0
    %s11 = scalar_lea.sflag [#allocation4], 1
    %12 = vsyncpa %s11, 0
    %13 = vsyncpa [#allocation7], 0
    %14 = vsyncpa [#allocation5], 0
    %s15 = scalar_lea.sflag [#allocation5], 1
    %16 = vsyncpa %s15, 0
    loop: start=0, step=1, limit=4
    $region2: #{tpu_custom_call.1} parent=1 // loop_pre_header
      _
    $region3: #{tpu_custom_call.1} parent=1 // loop_header
      %s18 = sphi 0, %s22
      %p19 = scmp.ge.s32.totalorder %s18, 4
      %s25 = sphi 0, %s37
      %s26 = sphi 0, %s33
      %s27 = sphi 0, %s25
      %s28 = sphi 0, %s26
      %s29 = sphi 0, %s27
      %s30 = sphi 0, %s28
      %s40 = sphi 0, %s42
      %s43 = sphi 0, %s40
      %s44 = sphi 0, %s43
      %s60 = sphi 0, %s44
      %s66 = sphi 0, %s68
      %s69 = sphi 0, %s66
      %s70 = sphi 0, %s69
      %s86 = sphi 0, %s70
      %s92 = sphi 0, %s94
      %s95 = sphi 0, %s92
      %s96 = sphi 0, %s95
      %s112 = sphi 0, %s96
      %s118 = sphi 0, %s120
      %s121 = sphi 0, %s118
      %s122 = sphi 0, %s121
      %s138 = sphi 0, %s122
      %s142 = sphi 0, %s142
      %s144 = sphi 0, %s142
      %s145 = sphi 0, %s144
      %s159 = sphi 0, %s145
      %s165 = sphi 0, %s167
      %s168 = sphi 0, %s165
      %s169 = sphi 0, %s168
      %s185 = sphi 0, %s169
    $region4: #{tpu_custom_call.1} parent=1 // loop_header_branch
      %21 = sbr.rel (%p19) target = $region8
    $region5: #{tpu_custom_call.1} parent=1 // loop_body
      %s23 = ssub.s32 %s18, 1
      %s24 = ssub.s32 %s18, 2
      %s31 = sadd.s32 1, %s26
      %p32 = scmp.ge.s32.totalorder %s31, 1
      %s33 = scalar_select %p32, 0, %s31
      %s34 = sadd.s32 1, %s25
      %s35 = scalar_select %p32, %s34, %s25
      %p36 = scmp.ge.s32.totalorder %s35, 2
      %s37 = scalar_select %p36, 0, %s35
      %s38 = ssub.s32 %s25, %s37
      %p39 = scmp.eq.s32.totalorder %s38, 0
      %s41 = sadd.s32 %s40, 1
      %s42 = scalar_select %p39, %s40, %s41
      %p45 = pneg %p39
      %p46 = scmp.eq.s32.totalorder %s18, 1
      %p47 = por %p45, %p46
      %p48 = scmp.ne.s32.totalorder %s40, %s43
      %p49 = scmp.eq.s32.totalorder %s18, 0
      %p50 = por %p48, %p49
      %p51 = scmp.ne.s32.totalorder %s40, %s43
      %p52 = scmp.eq.s32.totalorder %s23, 1
      %p53 = por %p51, %p52
      %p54 = scmp.ne.s32.totalorder %s43, %s44
      %p55 = scmp.eq.s32.totalorder %s23, 0
      %p56 = por %p54, %p55
      %p57 = scmp.ne.s32.totalorder %s43, %s44
      %p58 = scmp.eq.s32.totalorder %s24, 1
      %p59 = por %p57, %p58
      %p61 = scmp.ne.s32.totalorder %s44, %s60
      %p62 = scmp.eq.s32.totalorder %s24, 0
      %p63 = por %p61, %p62
      %s64 = ssub.s32 %s26, %s33
      %p65 = scmp.eq.s32.totalorder %s64, 0
      %s67 = sadd.s32 %s66, 1
      %s68 = scalar_select %p65, %s66, %s67
      %p71 = pneg %p65
      %p72 = scmp.eq.s32.totalorder %s18, 1
      %p73 = por %p71, %p72
      %p74 = scmp.ne.s32.totalorder %s66, %s69
      %p75 = scmp.eq.s32.totalorder %s18, 0
      %p76 = por %p74, %p75
      %p77 = scmp.ne.s32.totalorder %s66, %s69
      %p78 = scmp.eq.s32.totalorder %s23, 1
      %p79 = por %p77, %p78
      %p80 = scmp.ne.s32.totalorder %s69, %s70
      %p81 = scmp.eq.s32.totalorder %s23, 0
      %p82 = por %p80, %p81
      %p83 = scmp.ne.s32.totalorder %s69, %s70
      %p84 = scmp.eq.s32.totalorder %s24, 1
      %p85 = por %p83, %p84
      %p87 = scmp.ne.s32.totalorder %s70, %s86
      %p88 = scmp.eq.s32.totalorder %s24, 0
      %p89 = por %p87, %p88
      %s90 = ssub.s32 %s26, %s33
      %p91 = scmp.eq.s32.totalorder %s90, 0
      %s93 = sadd.s32 %s92, 1
      %s94 = scalar_select %p91, %s92, %s93
      %p97 = pneg %p91
      %p98 = scmp.eq.s32.totalorder %s18, 1
      %p99 = por %p97, %p98
      %p100 = scmp.ne.s32.totalorder %s92, %s95
      %p101 = scmp.eq.s32.totalorder %s18, 0
      %p102 = por %p100, %p101
      %p103 = scmp.ne.s32.totalorder %s92, %s95
      %p104 = scmp.eq.s32.totalorder %s23, 1
      %p105 = por %p103, %p104
      %p106 = scmp.ne.s32.totalorder %s95, %s96
      %p107 = scmp.eq.s32.totalorder %s23, 0
      %p108 = por %p106, %p107
      %p109 = scmp.ne.s32.totalorder %s95, %s96
      %p110 = scmp.eq.s32.totalorder %s24, 1
      %p111 = por %p109, %p110
      %p113 = scmp.ne.s32.totalorder %s96, %s112
      %p114 = scmp.eq.s32.totalorder %s24, 0
      %p115 = por %p113, %p114
      %s116 = ssub.s32 %s26, %s33
      %p117 = scmp.eq.s32.totalorder %s116, 0
      %s119 = sadd.s32 %s118, 1
      %s120 = scalar_select %p117, %s118, %s119
      %p123 = pneg %p117
      %p124 = scmp.eq.s32.totalorder %s18, 1
      %p125 = por %p123, %p124
      %p126 = scmp.ne.s32.totalorder %s118, %s121
      %p127 = scmp.eq.s32.totalorder %s18, 0
      %p128 = por %p126, %p127
      %p129 = scmp.ne.s32.totalorder %s118, %s121
      %p130 = scmp.eq.s32.totalorder %s23, 1
      %p131 = por %p129, %p130
      %p132 = scmp.ne.s32.totalorder %s121, %s122
      %p133 = scmp.eq.s32.totalorder %s23, 0
      %p134 = por %p132, %p133
      %p135 = scmp.ne.s32.totalorder %s121, %s122
      %p136 = scmp.eq.s32.totalorder %s24, 1
      %p137 = por %p135, %p136
      %p139 = scmp.ne.s32.totalorder %s122, %s138
      %p140 = scmp.eq.s32.totalorder %s24, 0
      %p141 = por %p139, %p140
      %s143 = sadd.s32 %s142, 1
      %p146 = scmp.eq.s32.totalorder %s18, 1
      %p147 = scmp.ne.s32.totalorder %s142, %s144
      %p148 = scmp.eq.s32.totalorder %s18, 0
      %p149 = por %p147, %p148
      %p150 = scmp.ne.s32.totalorder %s142, %s144
      %p151 = scmp.eq.s32.totalorder %s23, 1
      %p152 = por %p150, %p151
      %p153 = scmp.ne.s32.totalorder %s144, %s145
      %p154 = scmp.eq.s32.totalorder %s23, 0
      %p155 = por %p153, %p154
      %p156 = scmp.ne.s32.totalorder %s144, %s145
      %p157 = scmp.eq.s32.totalorder %s24, 1
      %p158 = por %p156, %p157
      %p160 = scmp.ne.s32.totalorder %s145, %s159
      %p161 = scmp.eq.s32.totalorder %s24, 0
      %p162 = por %p160, %p161
      %s163 = ssub.s32 %s25, %s37
      %p164 = scmp.eq.s32.totalorder %s163, 0
      %s166 = sadd.s32 %s165, 1
      %s167 = scalar_select %p164, %s165, %s166
      %p170 = pneg %p164
      %p171 = scmp.eq.s32.totalorder %s18, 1
      %p172 = por %p170, %p171
      %p173 = scmp.ne.s32.totalorder %s165, %s168
      %p174 = scmp.eq.s32.totalorder %s18, 0
      %p175 = por %p173, %p174
      %p176 = scmp.ne.s32.totalorder %s165, %s168
      %p177 = scmp.eq.s32.totalorder %s23, 1
      %p178 = por %p176, %p177
      %p179 = scmp.ne.s32.totalorder %s168, %s169
      %p180 = scmp.eq.s32.totalorder %s23, 0
      %p181 = por %p179, %p180
      %p182 = scmp.ne.s32.totalorder %s168, %s169
      %p183 = scmp.eq.s32.totalorder %s24, 1
      %p184 = por %p182, %p183
      %p186 = scmp.ne.s32.totalorder %s169, %s185
      %p187 = scmp.eq.s32.totalorder %s24, 0
      %p188 = por %p186, %p187
      %p189 = scmp.le.s32.totalorder 1, %s18
      %p190 = scmp.lt.s32.totalorder %s18, 3
      %p191 = pnand %p189, %p190
      %p192 = pneg %p191
      // Predicated region
      $region9: #{tpu_custom_call.1} parent=5 // pred_check
        _
      $region10: #{tpu_custom_call.1} parent=5 // pred_check_branch
        %194 = sbr.rel (%p191) target = $region12
      $region11: #{tpu_custom_call.1} parent=5 // pred_region
        %s195 = ssub.s32 %s18, 1
        // Predicated region
        $region13: #{tpu_custom_call.1} parent=11 // pred_check
          %p196 = pneg %p82
        $region14: #{tpu_custom_call.1} parent=11 // pred_check_branch
          %198 = sbr.rel (%p196) target = $region16
        $region15: #{tpu_custom_call.1} parent=11 // pred_region
          %s200 = ssub.s32 1024, 1024
          %201 = vsyncadd [#allocation7], %s200
          %s202 = smul.addr %s28, 64
          %s203 = scalar_lea.hbm %s1, %s202
          %s204 = sshll.u32 [#allocation6], 4
          %s205 = int_to_ptr.vmem [resolvable:$true] %s204
          %210 = dma.hbm_to_vmem [thread:$0]  %s203, 1024, %s205, [#allocation7], 64, 64, 4
        $region16: #{tpu_custom_call.1} parent=11 // pred_fallthru
          _
        // Predicated region
        $region17: #{tpu_custom_call.1} parent=11 // pred_check
          %p211 = pneg %p108
        $region18: #{tpu_custom_call.1} parent=11 // pred_check_branch
          %213 = sbr.rel (%p211) target = $region20
        $region19: #{tpu_custom_call.1} parent=11 // pred_region
          %p214 = scmp.lt.s32.totalorder %s28, 0
          %s215 = scalar_select %p214, %s28, 0
          %s216 = scalar_lea.vmem %s2, %s215
        $region20: #{tpu_custom_call.1} parent=11 // pred_fallthru
          _
        // Predicated region
        $region21: #{tpu_custom_call.1} parent=11 // pred_check
          %p217 = pneg %p134
        $region22: #{tpu_custom_call.1} parent=11 // pred_check_branch
          %219 = sbr.rel (%p217) target = $region24
        $region23: #{tpu_custom_call.1} parent=11 // pred_region
          %s220 = smul.u32 16, %s28
          %s222 = ssub.s32 1024, 1024
          %223 = vsyncadd [#allocation7], %s222
          %s224 = smul.addr %s220, 64
          %s225 = scalar_lea.hbm %s3, %s224
          %s226 = sshll.u32 [#allocation8], 4
          %s227 = int_to_ptr.vmem [resolvable:$true] %s226
          %232 = dma.hbm_to_vmem [thread:$0]  %s225, 1024, %s227, [#allocation7], 64, 64, 4
        $region24: #{tpu_custom_call.1} parent=11 // pred_fallthru
          _
        // Predicated region
        $region25: #{tpu_custom_call.1} parent=11 // pred_check
          %p233 = pneg %p155
        $region26: #{tpu_custom_call.1} parent=11 // pred_check_branch
          %235 = sbr.rel (%p233) target = $region28
        $region27: #{tpu_custom_call.1} parent=11 // pred_region
          _
        $region28: #{tpu_custom_call.1} parent=11 // pred_fallthru
          _
      $region12: #{tpu_custom_call.1} parent=5 // pred_fallthru
        _
      %p236 = scmp.lt.s32.totalorder %s18, 2
      // Predicated region
      $region29: #{tpu_custom_call.1} parent=5 // pred_check
        %p237 = pneg %p236
      $region30: #{tpu_custom_call.1} parent=5 // pred_check_branch
        %239 = sbr.rel (%p237) target = $region32
      $region31: #{tpu_custom_call.1} parent=5 // pred_region
        // Predicated region
        $region33: #{tpu_custom_call.1} parent=31 // pred_check
          %p240 = pneg %p50
        $region34: #{tpu_custom_call.1} parent=31 // pred_check_branch
          %242 = sbr.rel (%p240) target = $region36
        $region35: #{tpu_custom_call.1} parent=31 // pred_region
          %s243 = sand.u32 %s40, 1
          %s244 = scalar_lea.sflag [#allocation4], %s243
          %s245 = sand.u32 %s40, 1
          %s246 = smul.addr %s245, 8
          %s247 = scalar_lea.vmem [#allocation3], %s246
          %s249 = ssub.s32 128, 128
          %250 = vsyncadd %s244, %s249
          %s251 = smul.addr %s25, 128
          %s252 = scalar_lea.hbm %s0, %s251
          %s254 = sshll.u32 %s247, 4
          %s255 = int_to_ptr.vmem [resolvable:$true] %s254
          %257 = dma.hbm_to_vmem [thread:$0]  %s252, 128, %s255, %s244
        $region36: #{tpu_custom_call.1} parent=31 // pred_fallthru
          _
      $region32: #{tpu_custom_call.1} parent=5 // pred_fallthru
        _
      %p258 = scmp.le.s32.totalorder 1, %s18
      %p259 = scmp.lt.s32.totalorder %s18, 3
      %p260 = pnand %p258, %p259
      %p261 = pneg %p260
      // Predicated region
      $region37: #{tpu_custom_call.1} parent=5 // pred_check
        _
      $region38: #{tpu_custom_call.1} parent=5 // pred_check_branch
        %263 = sbr.rel (%p260) target = $region40
      $region39: #{tpu_custom_call.1} parent=5 // pred_region
        %s264 = ssub.s32 %s18, 1
        %s265 = sand.u32 %s43, 1
        %s266 = scalar_lea.sflag [#allocation4], %s265
        %s267 = sand.u32 %s43, 1
        %s268 = smul.addr %s267, 8
        %s269 = scalar_lea.vmem [#allocation3], %s268
        // Predicated region
        $region41: #{tpu_custom_call.1} parent=39 // pred_check
          %p270 = pneg %p56
        $region42: #{tpu_custom_call.1} parent=39 // pred_check_branch
          %272 = sbr.rel (%p270) target = $region44
        $region43: #{tpu_custom_call.1} parent=39 // pred_region
          %273 = dma.done %s266, 128
        $region44: #{tpu_custom_call.1} parent=39 // pred_fallthru
          _
        // Predicated region
        $region45: #{tpu_custom_call.1} parent=39 // pred_check
          %p274 = pneg %p82
        $region46: #{tpu_custom_call.1} parent=39 // pred_check_branch
          %276 = sbr.rel (%p274) target = $region48
        $region47: #{tpu_custom_call.1} parent=39 // pred_region
          %277 = dma.done [#allocation7], 1024
        $region48: #{tpu_custom_call.1} parent=39 // pred_fallthru
          _
        // Predicated region
        $region49: #{tpu_custom_call.1} parent=39 // pred_check
          %p278 = pneg %p134
        $region50: #{tpu_custom_call.1} parent=39 // pred_check_branch
          %280 = sbr.rel (%p278) target = $region52
        $region51: #{tpu_custom_call.1} parent=39 // pred_region
          %281 = dma.done [#allocation7], 1024
        $region52: #{tpu_custom_call.1} parent=39 // pred_fallthru
          _
        %s282 = sand.u32 %s43, 1
        %s283 = scalar_lea.sflag [#allocation4], %s282
        %s284 = sand.u32 %s43, 1
        %s285 = smul.addr %s284, 8
        %s286 = scalar_lea.vmem [#allocation3], %s285
        %p287 = pneg %p56
        %p288 = pneg %p53
        %p289 = pneg %p82
        %p290 = pneg %p79
        %p291 = scmp.lt.s32.totalorder %s28, 0
        %s292 = scalar_select %p291, %s28, 0
        %s293 = scalar_lea.vmem %s2, %s292
        %p294 = pneg %p108
        %p295 = pneg %p105
        %p296 = pneg %p134
        %p297 = pneg %p131
        %p298 = pneg %p155
        %p299 = pneg %p152
        %p300 = pneg %p181
        %p301 = pneg %p178
        %s302 = sand.u32 %s168, 1
        %s303 = scalar_lea.sflag [#allocation5], %s302
        %s304 = sand.u32 %s168, 1
        %s305 = smul.addr %s304, 8
        %s306 = scalar_lea.vmem [#allocation9], %s305
        %p307 = scmp.lt.s32.totalorder %s28, 0
        %s308 = scalar_select %p307, %s28, 0
        %s309 = scalar_lea.vmem %s2, %s308
        %s310 = smul.u32 16, %s28
        %p312 = scmp.eq.s32.totalorder %s28, 0
        // Predicated region
        $region53: #{tpu_custom_call.1} parent=39 // pred_check
          %p313 = pneg %p312
        $region54: #{tpu_custom_call.1} parent=39 // pred_check_branch
          %315 = sbr.rel (%p313) target = $region56
        $region55: #{tpu_custom_call.1} parent=39 // pred_region
          %316 = vst [vmem:[#allocation2] sm:$0xff] 0.0
        $region56: #{tpu_custom_call.1} parent=39 // pred_fallthru
          _
        %v317 = vld [vmem:[%s269] sm:$0xff]
        %v318 = vpack.c.bf16 %v317, %v317
        %v319 = vld [vmem:[#allocation6] sm:$0xf]
        %v320 = vld [vmem:[#allocation6 + $0x4] sm:$0xf]
        %v321 = vld [vmem:[#allocation6 + $0x8] sm:$0xf]
        %v322 = vld [vmem:[#allocation6 + $0xc] sm:$0xf]
        %v323 = vld [vmem:[#allocation6 + $0x10] sm:$0xf]
        %v324 = vld [vmem:[#allocation6 + $0x14] sm:$0xf]
        %v325 = vld [vmem:[#allocation6 + $0x18] sm:$0xf]
        %v326 = vld [vmem:[#allocation6 + $0x1c] sm:$0xf]
        %v327 = vld [vmem:[#allocation6 + $0x20] sm:$0xf]
        %v328 = vld [vmem:[#allocation6 + $0x24] sm:$0xf]
        %v329 = vld [vmem:[#allocation6 + $0x28] sm:$0xf]
        %v330 = vld [vmem:[#allocation6 + $0x2c] sm:$0xf]
        %v331 = vld [vmem:[#allocation6 + $0x30] sm:$0xf]
        %v332 = vld [vmem:[#allocation6 + $0x34] sm:$0xf]
        %v333 = vld [vmem:[#allocation6 + $0x38] sm:$0xf]
        %v334 = vld [vmem:[#allocation6 + $0x3c] sm:$0xf]
        %v335 = vld [vmem:[%s309] sm:$0x1]
        %v337 = vlaneseq
        %v338 = vshrl.u32 %v337, 7
        %v339 = vsub.s32 0, %v338
        %v340 = vrot.slane %v335, %v339
        %v358 = vunpack.c.l.b16 %v319
        %v359 = vunpack.c.l.b16 %v320
        %v360 = vunpack.c.l.b16 %v321
        %v361 = vunpack.c.l.b16 %v322
        %v362 = vunpack.c.l.b16 %v323
        %v363 = vunpack.c.l.b16 %v324
        %v364 = vunpack.c.l.b16 %v325
        %v365 = vunpack.c.l.b16 %v326
        %v366 = vunpack.c.l.b16 %v327
        %v367 = vunpack.c.l.b16 %v328
        %v368 = vunpack.c.l.b16 %v329
        %v369 = vunpack.c.l.b16 %v330
        %v370 = vunpack.c.l.b16 %v331
        %v371 = vunpack.c.l.b16 %v332
        %v372 = vunpack.c.l.b16 %v333
        %v373 = vunpack.c.l.b16 %v334
        %v374 = vpack.c.b16 %v359, %v358
        %v375 = vpack.c.b16 %v361, %v360
        %v376 = vpack.c.b16 %v363, %v362
        %v377 = vpack.c.b16 %v365, %v364
        %v378 = vpack.c.b16 %v367, %v366
        %v379 = vpack.c.b16 %v369, %v368
        %v380 = vpack.c.b16 %v371, %v370
        %v381 = vpack.c.b16 %v373, %v372
        %390 = vmatprep.subr.bf16.mxu0 0
        %391 = vmatpush1.bf16.msra.mxu0 %v381
        %392 = vmatprep.subr.bf16.mxu0 0
        %393 = vmatpush1.bf16.msra.mxu0 %v380
        %394 = vmatprep.subr.bf16.mxu0 0
        %395 = vmatpush1.bf16.msra.mxu0 %v379
        %396 = vmatprep.subr.bf16.mxu0 0
        %397 = vmatpush1.bf16.msra.mxu0 %v378
        %398 = vmatprep.subr.bf16.mxu0 0
        %399 = vmatpush1.bf16.msra.mxu0 %v377
        %400 = vmatprep.subr.bf16.mxu0 0
        %401 = vmatpush1.bf16.msra.mxu0 %v376
        %402 = vmatprep.subr.bf16.mxu0 0
        %403 = vmatpush1.bf16.msra.mxu0 %v375
        %404 = vmatprep.subr.bf16.mxu0 0
        %405 = vmatpush1.bf16.msra.mxu0 %v374
        %406 = vmatprep.subr.bf16.mxu0 0
        %407 = vmatpush2.bf16.msra.mxu0 0
        %408 = vmatprep.subr.bf16.mxu0 0
        %409 = vmatpush2.bf16.msra.mxu0 0
        %410 = vmatprep.subr.bf16.mxu0 0
        %411 = vmatpush2.bf16.msra.mxu0 0
        %412 = vmatprep.subr.bf16.mxu0 0
        %413 = vmatpush2.bf16.msra.mxu0 0
        %414 = vmatprep.subr.bf16.mxu0 0
        %415 = vmatpush2.bf16.msra.mxu0 0
        %416 = vmatprep.subr.bf16.mxu0 0
        %417 = vmatpush2.bf16.msra.mxu0 0
        %418 = vmatprep.subr.bf16.mxu0 0
        %419 = vmatpush2.bf16.msra.mxu0 0
        %420 = vmatprep.subr.bf16.mxu0 0
        %421 = vmatpush2.bf16.msra.mxu0 0
        %422 = vmatprep.mubr.bf16.mxu0 0
        %423 = vmatmul.mubr.bf16.gmra.mxu0 %v318
        %v424 = vpop.f32.mrf.mxu0
        %v425 = vadd.f32 %v340, %v424
        %v426 = vpop.f32.mrf.mxu0
        %v427 = vpop.f32.mrf.mxu0
        %v428 = vpop.f32.mrf.mxu0
        %429 = vdwg.mxu0
        %v430 = vmul.f32 %v425, 0.5
        %v431 = vmul.f32 %v425, 0.044715
        %v432 = vmul.f32 %v431, %v425
        %v433 = vmul.f32 %v432, %v425
        %v434 = vadd.f32 %v425, %v433
        %v435 = vmul.f32 %v434, 0.7978846
        %v436 = vtanh.pop %v435
        %v437 = vadd.f32 %v436, 1.0
        %v438 = vmul.f32 %v430, %v437
        %v439 = vld [vmem:[#allocation2] sm:$0xff]
        %v440 = vpack.c.bf16 %v438, %v438
        %v441 = vld [vmem:[#allocation8] sm:$0xf]
        %v442 = vld [vmem:[#allocation8 + $0x4] sm:$0xf]
        %v443 = vld [vmem:[#allocation8 + $0x8] sm:$0xf]
        %v444 = vld [vmem:[#allocation8 + $0xc] sm:$0xf]
        %v445 = vld [vmem:[#allocation8 + $0x10] sm:$0xf]
        %v446 = vld [vmem:[#allocation8 + $0x14] sm:$0xf]
        %v447 = vld [vmem:[#allocation8 + $0x18] sm:$0xf]
        %v448 = vld [vmem:[#allocation8 + $0x1c] sm:$0xf]
        %v449 = vld [vmem:[#allocation8 + $0x20] sm:$0xf]
        %v450 = vld [vmem:[#allocation8 + $0x24] sm:$0xf]
        %v451 = vld [vmem:[#allocation8 + $0x28] sm:$0xf]
        %v452 = vld [vmem:[#allocation8 + $0x2c] sm:$0xf]
        %v453 = vld [vmem:[#allocation8 + $0x30] sm:$0xf]
        %v454 = vld [vmem:[#allocation8 + $0x34] sm:$0xf]
        %v455 = vld [vmem:[#allocation8 + $0x38] sm:$0xf]
        %v456 = vld [vmem:[#allocation8 + $0x3c] sm:$0xf]
        %v473 = vunpack.c.l.b16 %v441
        %v474 = vunpack.c.l.b16 %v442
        %v475 = vunpack.c.l.b16 %v443
        %v476 = vunpack.c.l.b16 %v444
        %v477 = vunpack.c.l.b16 %v445
        %v478 = vunpack.c.l.b16 %v446
        %v479 = vunpack.c.l.b16 %v447
        %v480 = vunpack.c.l.b16 %v448
        %v481 = vunpack.c.l.b16 %v449
        %v482 = vunpack.c.l.b16 %v450
        %v483 = vunpack.c.l.b16 %v451
        %v484 = vunpack.c.l.b16 %v452
        %v485 = vunpack.c.l.b16 %v453
        %v486 = vunpack.c.l.b16 %v454
        %v487 = vunpack.c.l.b16 %v455
        %v488 = vunpack.c.l.b16 %v456
        %v489 = vpack.c.b16 %v474, %v473
        %v490 = vpack.c.b16 %v476, %v475
        %v491 = vpack.c.b16 %v478, %v477
        %v492 = vpack.c.b16 %v480, %v479
        %v493 = vpack.c.b16 %v482, %v481
        %v494 = vpack.c.b16 %v484, %v483
        %v495 = vpack.c.b16 %v486, %v485
        %v496 = vpack.c.b16 %v488, %v487
        %505 = vmatprep.subr.bf16.mxu0 0
        %506 = vmatpush1.bf16.msra.mxu0 %v496
        %507 = vmatprep.subr.bf16.mxu0 0
        %508 = vmatpush1.bf16.msra.mxu0 %v495
        %509 = vmatprep.subr.bf16.mxu0 0
        %510 = vmatpush1.bf16.msra.mxu0 %v494
        %511 = vmatprep.subr.bf16.mxu0 0
        %512 = vmatpush1.bf16.msra.mxu0 %v493
        %513 = vmatprep.subr.bf16.mxu0 0
        %514 = vmatpush1.bf16.msra.mxu0 %v492
        %515 = vmatprep.subr.bf16.mxu0 0
        %516 = vmatpush1.bf16.msra.mxu0 %v491
        %517 = vmatprep.subr.bf16.mxu0 0
        %518 = vmatpush1.bf16.msra.mxu0 %v490
        %519 = vmatprep.subr.bf16.mxu0 0
        %520 = vmatpush1.bf16.msra.mxu0 %v489
        %521 = vmatprep.subr.bf16.mxu0 0
        %522 = vmatpush2.bf16.msra.mxu0 0
        %523 = vmatprep.subr.bf16.mxu0 0
        %524 = vmatpush2.bf16.msra.mxu0 0
        %525 = vmatprep.subr.bf16.mxu0 0
        %526 = vmatpush2.bf16.msra.mxu0 0
        %527 = vmatprep.subr.bf16.mxu0 0
        %528 = vmatpush2.bf16.msra.mxu0 0
        %529 = vmatprep.subr.bf16.mxu0 0
        %530 = vmatpush2.bf16.msra.mxu0 0
        %531 = vmatprep.subr.bf16.mxu0 0
        %532 = vmatpush2.bf16.msra.mxu0 0
        %533 = vmatprep.subr.bf16.mxu0 0
        %534 = vmatpush2.bf16.msra.mxu0 0
        %535 = vmatprep.subr.bf16.mxu0 0
        %536 = vmatpush2.bf16.msra.mxu0 0
        %537 = vmatprep.mubr.bf16.mxu0 0
        %538 = vmatmul.mubr.bf16.gmra.mxu0 %v440
        %v539 = vpop.f32.mrf.mxu0
        %v540 = vadd.f32 0.0, %v539
        %v541 = vpop.f32.mrf.mxu0
        %v542 = vpop.f32.mrf.mxu0
        %v543 = vpop.f32.mrf.mxu0
        %544 = vdwg.mxu0
        %v545 = vadd.f32 %v439, %v540
        %546 = vst [vmem:[#allocation2] sm:$0xff] %v545
        // Predicated region
        $region57: #{tpu_custom_call.1} parent=39 // pred_check
          %p547 = pneg %p312
        $region58: #{tpu_custom_call.1} parent=39 // pred_check_branch
          %549 = sbr.rel (%p547) target = $region60
        $region59: #{tpu_custom_call.1} parent=39 // pred_region
          %v550 = vld [vmem:[#allocation2] sm:$0xff]
          %v551 = vld [vmem:[%s4] sm:$0x1]
          %v553 = vlaneseq
          %v554 = vshrl.u32 %v553, 7
          %v555 = vsub.s32 0, %v554
          %v556 = vrot.slane %v551, %v555
          %v558 = vadd.f32 %v550, %v556
          %559 = vst [vmem:[%s306] sm:$0xff] %v558
        $region60: #{tpu_custom_call.1} parent=39 // pred_fallthru
          _
        %s560 = sand.u32 %s168, 1
        %s561 = scalar_lea.sflag [#allocation5], %s560
        %s562 = sand.u32 %s168, 1
        %s563 = smul.addr %s562, 8
        %s564 = scalar_lea.vmem [#allocation9], %s563
        // Predicated region
        $region61: #{tpu_custom_call.1} parent=39 // pred_check
          %p565 = pneg %p178
        $region62: #{tpu_custom_call.1} parent=39 // pred_check_branch
          %567 = sbr.rel (%p565) target = $region64
        $region63: #{tpu_custom_call.1} parent=39 // pred_region
          %s569 = ssub.s32 128, 128
          %570 = vsyncadd %s561, %s569
          %s571 = smul.addr %s27, 128
          %s572 = scalar_lea.hbm %s5, %s571
          %s574 = sshll.u32 %s564, 4
          %s575 = int_to_ptr.vmem [resolvable:$true] %s574
          %577 = dma.vmem_to_hbm [thread:$0]  %s575, 128, %s572, %s561
        $region64: #{tpu_custom_call.1} parent=39 // pred_fallthru
          _
      $region40: #{tpu_custom_call.1} parent=5 // pred_fallthru
        _
      %p578 = scmp.le.s32.totalorder 2, %s18
      // Predicated region
      $region65: #{tpu_custom_call.1} parent=5 // pred_check
        %p579 = pneg %p578
      $region66: #{tpu_custom_call.1} parent=5 // pred_check_branch
        %581 = sbr.rel (%p579) target = $region68
      $region67: #{tpu_custom_call.1} parent=5 // pred_region
        %s582 = ssub.s32 %s18, 2
        // Predicated region
        $region69: #{tpu_custom_call.1} parent=67 // pred_check
          %p583 = pneg %p184
        $region70: #{tpu_custom_call.1} parent=67 // pred_check_branch
          %585 = sbr.rel (%p583) target = $region72
        $region71: #{tpu_custom_call.1} parent=67 // pred_region
          %s586 = sand.u32 %s169, 1
          %s587 = scalar_lea.sflag [#allocation5], %s586
          %s588 = sand.u32 %s169, 1
          %s589 = smul.addr %s588, 8
          %s590 = scalar_lea.vmem [#allocation9], %s589
          %591 = dma.done %s587, 128
        $region72: #{tpu_custom_call.1} parent=67 // pred_fallthru
          _
      $region68: #{tpu_custom_call.1} parent=5 // pred_fallthru
        _
    $region6: #{tpu_custom_call.1} parent=1 // loop_footer
      %s22 = sadd.s32 1, %s18
    $region7: #{tpu_custom_call.1} parent=1 // loop_footer_branch
      %17 = sbr.rel target = $region3
    $region8: #{tpu_custom_call.1} parent=1 // loop_exit
      _
    %592 = vsyncpa [#allocation4], 1
    %s593 = scalar_lea.sflag [#allocation4], 1
    %594 = vsyncpa %s593, 1
    %595 = vsyncpa [#allocation7], 1
    %596 = vsyncpa [#allocation5], 1
    %s597 = scalar_lea.sflag [#allocation5], 1
    %598 = vsyncpa %s597, 1

</llo_original>
